<compile_context>
chip_gen: v7x
topology: tpu7x:2x2x1
jax: 0.10.0
libtpu: 0.0.40
codegen_flags: <defaults>
</compile_context>

<pallas_src>
import jax
import jax.numpy as jnp
from jax.experimental import pallas as pl
from jax.experimental.pallas import tpu as pltpu


def _conv3x3_bn_relu_kernel(x_ref, w_ref, shift_ref, o_ref):
    # x_ref:     (TH+2, Wp, Cin)  compute dtype (bf16) -- haloed row slab
    # w_ref:     (3, 3*Cin, TN)   compute dtype -- BN-scale-folded weights,
    #                             dy-major, (dx, cin)-flattened K
    # shift_ref: (1, TN)          f32 -- folded BN shift = beta - mean*scale
    # o_ref:     (TH, W, TN)
    TH, W, TN = o_ref.shape
    Cin = x_ref.shape[-1]

    acc = None
    # One dy-group per iteration: im2col over dx only (K = 3*Cin), then one
    # accumulating MXU matmul.  Taps are sliced straight off the delivered
    # slab ref -- no scratch slab, no 9x-tile patch.
    for dy in range(3):
        patch = jnp.concatenate(
            [x_ref[dy:dy + TH, dx:dx + W, :] for dx in range(3)], axis=-1,
        ).reshape(TH * W, 3 * Cin)
        part = jnp.dot(patch, w_ref[dy], preferred_element_type=jnp.float32)
        acc = part if acc is None else acc + part

    y = jnp.maximum(acc + shift_ref[...], 0.0)          # BN shift + ReLU (f32)
    o_ref[...] = y.reshape(TH, W, TN).astype(o_ref.dtype)


def _vmem_capacity_bytes():
    """Physical VMEM per core at trace time (fallback: v7x's 64 MiB)."""
    try:
        info = pltpu.get_tpu_info()
        cap = getattr(info, "vmem_capacity_bytes", None)
        if cap:
            return int(cap)
    except Exception:
        pass
    return 64 * 1024 * 1024


def _estimate_step_vmem(TH, W, Cin, TN, in_itemsize, out_itemsize):
    """Per-grid-step VMEM working set, including hidden intermediates."""
    Wp = W + 2
    slab = 2 * (TH + 2) * Wp * Cin * in_itemsize        # double-buffered input slab
    outb = 2 * TH * W * TN * out_itemsize                # double-buffered output
    wgt = 2 * 3 * (3 * Cin) * TN * in_itemsize           # double-buffered weight tile
    patch = 2 * TH * W * (3 * Cin) * in_itemsize         # dy-group im2col (<=2 live)
    acc = TH * W * TN * 4                                 # f32 accumulator
    return slab + outb + wgt + patch + acc


def _pick_row_tile(H, W, Cin, TN, budget_bytes, in_itemsize, out_itemsize):
    """Largest divisor of H whose per-step working set fits the budget."""
    best = 1
    for t in range(1, H + 1):
        if H % t:
            continue
        if _estimate_step_vmem(t, W, Cin, TN, in_itemsize, out_itemsize) <= budget_bytes:
            best = t
    return best


def _pick_cout_tile(Cout):
    """Lane-dense, MXU-width-matched Cout tile when possible."""
    for tn in (256, 128):
        if Cout % tn == 0:
            return tn
    return Cout            # tiny-Cout layers: single (masked) block


def conv3x3_bn_relu(x_nchw, weight_oihw, gamma, beta, running_mean, running_var,
                    eps=1e-5, row_tile=None, compute_dtype=jnp.bfloat16,
                    out_dtype=None):
    """Forward of Conv3x3: relu(bn(conv(x))).  x_nchw: (N, Cin, H, W)."""
    N, Cin, H, W = x_nchw.shape
    Cout = weight_oihw.shape[0]
    out_dtype = x_nchw.dtype if out_dtype is None else out_dtype

    TN = _pick_cout_tile(Cout)
    nC = Cout // TN

    vmem_cap = _vmem_capacity_bytes()
    budget = vmem_cap // 2
    vmem_limit = (vmem_cap * 3) // 4

    in_itemsize = jnp.dtype(compute_dtype).itemsize
    out_itemsize = jnp.dtype(out_dtype).itemsize
    if row_tile is None:
        row_tile = _pick_row_tile(H, W, Cin, TN, budget, in_itemsize, out_itemsize)
    TH = row_tile
    if H % TH:
        raise ValueError("row_tile must evenly divide H")
    nT = H // TH
    Wp = W + 2

    # ---- wrapper-side prep (fused by XLA with the NCHW->NHWC transpose) ----
    x_nhwc = jnp.transpose(x_nchw, (0, 2, 3, 1))                   # (N,H,W,Cin)
    x_pad = jnp.pad(x_nhwc, ((0, 0), (1, 1), (1, 1), (0, 0)))      # (N,H+2,Wp,Cin)
    x_pad = x_pad.astype(compute_dtype)
    # Overlapping haloed row slabs: (N, nT, TH+2, Wp, Cin).  A single blocked
    # in_spec then delivers each slab directly -- no in-kernel halo assembly.
    if nT == 1:
        x_slabs = x_pad[:, None]
    else:
        x_slabs = jnp.stack(
            [x_pad[:, h * TH:h * TH + TH + 2] for h in range(nT)], axis=1)

    # Conv weights: OIHW -> (ky, kx, Cin, Cout); fold BN scale in f32, then
    # cast to the compute dtype and flatten K as (dx, cin) per dy-group.
    scale = (gamma / jnp.sqrt(running_var + eps)).astype(jnp.float32)       # (Cout,)
    shift = (beta - running_mean * scale).astype(jnp.float32).reshape(1, Cout)
    w = jnp.transpose(weight_oihw, (2, 3, 1, 0)).astype(jnp.float32)        # (3,3,Cin,Cout)
    w = w * scale[None, None, None, :]
    w3 = w.reshape(3, 3 * Cin, Cout).astype(compute_dtype)

    # Grid: (Cout tiles, batch, row tiles).  c outermost so the weight/shift
    # tiles stay resident across (n, h); all axes are independent (parallel),
    # so the v7x megacore can shard them.
    out_nhwc = pl.pallas_call(
        _conv3x3_bn_relu_kernel,
        out_shape=jax.ShapeDtypeStruct((N, H, W, Cout), out_dtype),
        grid_spec=pltpu.PrefetchScalarGridSpec(
            num_scalar_prefetch=0,
            grid=(nC, N, nT),
            in_specs=[
                # haloed row slab, delivered whole (squeezed N/nT dims)
                pl.BlockSpec((None, None, TH + 2, Wp, Cin),
                             lambda c, n, h: (n, h, 0, 0, 0)),
                # BN-folded weights: resident across (n, h), re-fetched per c
                pl.BlockSpec((3, 3 * Cin, TN), lambda c, n, h: (0, 0, c)),
                # folded BN shift
                pl.BlockSpec((1, TN), lambda c, n, h: (0, c)),
            ],
            out_specs=pl.BlockSpec((None, TH, W, TN),
                                   lambda c, n, h: (n, h, 0, c)),
        ),
        compiler_params=pltpu.CompilerParams(
            dimension_semantics=("parallel", "parallel", "parallel"),
            vmem_limit_bytes=int(vmem_limit),
        ),
    )(x_slabs, w3, shift)

    return jnp.transpose(out_nhwc, (0, 3, 1, 2))                   # (N,Cout,H,W)


def _reference(x_nchw, weight_oihw, gamma, beta, running_mean, running_var,
               eps=1e-5):
    """Pure-JAX f32 reference (same module semantics) for correctness checks."""
    y = jax.lax.conv_general_dilated(
        x_nchw, weight_oihw,
        window_strides=(1, 1), padding=((1, 1), (1, 1)),
        dimension_numbers=("NCHW", "OIHW", "NCHW"),
    )
    scale = gamma / jnp.sqrt(running_var + eps)
    shift = beta - running_mean * scale
    y = y * scale[None, :, None, None] + shift[None, :, None, None]
    return jnp.maximum(y, 0.0)


if __name__ == "__main__":
    key = jax.random.PRNGKey(0)
    k_x, k_w, k_g, k_b, k_m, k_v = jax.random.split(key, 6)

    N, Cin, H, W = 2, 4, 16, 16
    Cout = 8

    x = jax.random.normal(k_x, (N, Cin, H, W), dtype=jnp.float32)
    weight = jax.random.normal(k_w, (Cout, Cin, 3, 3), dtype=jnp.float32) * 0.1
    gamma = 1.0 + 0.1 * jax.random.normal(k_g, (Cout,), dtype=jnp.float32)
    beta = 0.1 * jax.random.normal(k_b, (Cout,), dtype=jnp.float32)
    running_mean = 0.1 * jax.random.normal(k_m, (Cout,), dtype=jnp.float32)
    running_var = jnp.abs(1.0 + 0.1 * jax.random.normal(k_v, (Cout,),
                                                        dtype=jnp.float32))

    ref = _reference(x, weight, gamma, beta, running_mean, running_var)

    # row_tile=8 -> grid (nC=1, N=2, nT=2): exercises the overlapping-slab,
    # row-tiled path (4 balanced parallel steps).
    out = conv3x3_bn_relu(x, weight, gamma, beta, running_mean, running_var,
                          row_tile=8)
    out = jax.block_until_ready(out)
    assert out.shape == (N, Cout, H, W)
    # bf16 conv inputs/weights (f32 accumulation) vs f32 reference.
    err = float(jnp.max(jnp.abs(out - ref)))
    assert err < 5e-2, f"max abs err {err}"

    # Auto tile pick (TH=H -> single slab per image) for coverage of that path.
    out2 = conv3x3_bn_relu(x, weight, gamma, beta, running_mean, running_var)
    out2 = jax.block_until_ready(out2)
    err2 = float(jnp.max(jnp.abs(out2 - ref)))
    assert err2 < 5e-2, f"max abs err {err2}"

    print("KERNEL_OK")
</pallas_src>

<mosaic_0001>
module attributes {stable_mosaic.version = 11 : i64} {
  func.func @_conv3x3_bn_relu_kernel(%arg0: i32, %arg1: i32, %arg2: i32, %arg3: memref<1x1x10x18x4xbf16, #tpu.memory_space<vmem>>, %arg4: memref<3x12x8xbf16, #tpu.memory_space<vmem>>, %arg5: memref<1x8xf32, #tpu.memory_space<vmem>>, %arg6: memref<1x8x16x8xf32, #tpu.memory_space<vmem>>) attributes {dimension_semantics = [#tpu.dimension_semantics<parallel>, #tpu.dimension_semantics<parallel>, #tpu.dimension_semantics<parallel>], iteration_bounds = array<i64: 1, 2, 2>, scalar_prefetch = 0 : i64, scratch_operands = 0 : i64, tpu.core_type = #tpu.core_type<tc>, window_params = [{transform_indices = @transform_0, window_bounds = array<i64: 1, 1, 10, 18, 4>}, {transform_indices = @transform_1, window_bounds = array<i64: 3, 12, 8>}, {transform_indices = @transform_2, window_bounds = array<i64: 1, 8>}, {transform_indices = @transform_3, window_bounds = array<i64: 1, 8, 16, 8>}]} {
    %c0 = arith.constant 0 : index
    %c0_0 = arith.constant 0 : index
    %c0_1 = arith.constant 0 : index
    %c0_2 = arith.constant 0 : index
    %c0_3 = arith.constant 0 : index
    %0 = vector.load %arg3[%c0, %c0_0, %c0_1, %c0_2, %c0_3] : memref<1x1x10x18x4xbf16, #tpu.memory_space<vmem>>, vector<1x1x8x16x4xbf16>
    %1 = vector.shape_cast %0 : vector<1x1x8x16x4xbf16> to vector<8x16x4xbf16>
    %c0_4 = arith.constant 0 : index
    %c0_5 = arith.constant 0 : index
    %c0_6 = arith.constant 0 : index
    %c1 = arith.constant 1 : index
    %c0_7 = arith.constant 0 : index
    %2 = vector.load %arg3[%c0_4, %c0_5, %c0_6, %c1, %c0_7] : memref<1x1x10x18x4xbf16, #tpu.memory_space<vmem>>, vector<1x1x8x16x4xbf16>
    %3 = vector.shape_cast %2 : vector<1x1x8x16x4xbf16> to vector<8x16x4xbf16>
    %c0_8 = arith.constant 0 : index
    %c0_9 = arith.constant 0 : index
    %c0_10 = arith.constant 0 : index
    %c2 = arith.constant 2 : index
    %c0_11 = arith.constant 0 : index
    %4 = vector.load %arg3[%c0_8, %c0_9, %c0_10, %c2, %c0_11] : memref<1x1x10x18x4xbf16, #tpu.memory_space<vmem>>, vector<1x1x8x16x4xbf16>
    %5 = vector.shape_cast %4 : vector<1x1x8x16x4xbf16> to vector<8x16x4xbf16>
    %6 = tpu.concatenate %1, %3, %5 in 2 : vector<8x16x4xbf16>, vector<8x16x4xbf16>, vector<8x16x4xbf16> -> vector<8x16x12xbf16>
    %7 = vector.shape_cast %6 : vector<8x16x12xbf16> to vector<128x12xbf16>
    %c0_12 = arith.constant 0 : index
    %c0_13 = arith.constant 0 : index
    %c0_14 = arith.constant 0 : index
    %8 = vector.load %arg4[%c0_12, %c0_13, %c0_14] : memref<3x12x8xbf16, #tpu.memory_space<vmem>>, vector<1x12x8xbf16>
    %9 = vector.shape_cast %8 : vector<1x12x8xbf16> to vector<12x8xbf16>
    %cst = arith.constant dense<0.000000e+00> : vector<128x8xf32>
    %10 = tpu.matmul %7, %9, %cst {dimension_numbers = #tpu.dot_dimension_numbers<[1], [0], [0], [1], [0, 0, 1, 1], [], []>} : vector<128x12xbf16>, vector<12x8xbf16>, vector<128x8xf32> -> vector<128x8xf32>
    %c0_15 = arith.constant 0 : index
    %c0_16 = arith.constant 0 : index
    %c1_17 = arith.constant 1 : index
    %c0_18 = arith.constant 0 : index
    %c0_19 = arith.constant 0 : index
    %11 = vector.load %arg3[%c0_15, %c0_16, %c1_17, %c0_18, %c0_19] : memref<1x1x10x18x4xbf16, #tpu.memory_space<vmem>>, vector<1x1x8x16x4xbf16>
    %12 = vector.shape_cast %11 : vector<1x1x8x16x4xbf16> to vector<8x16x4xbf16>
    %c0_20 = arith.constant 0 : index
    %c0_21 = arith.constant 0 : index
    %c1_22 = arith.constant 1 : index
    %c1_23 = arith.constant 1 : index
    %c0_24 = arith.constant 0 : index
    %13 = vector.load %arg3[%c0_20, %c0_21, %c1_22, %c1_23, %c0_24] : memref<1x1x10x18x4xbf16, #tpu.memory_space<vmem>>, vector<1x1x8x16x4xbf16>
    %14 = vector.shape_cast %13 : vector<1x1x8x16x4xbf16> to vector<8x16x4xbf16>
    %c0_25 = arith.constant 0 : index
    %c0_26 = arith.constant 0 : index
    %c1_27 = arith.constant 1 : index
    %c2_28 = arith.constant 2 : index
    %c0_29 = arith.constant 0 : index
    %15 = vector.load %arg3[%c0_25, %c0_26, %c1_27, %c2_28, %c0_29] : memref<1x1x10x18x4xbf16, #tpu.memory_space<vmem>>, vector<1x1x8x16x4xbf16>
    %16 = vector.shape_cast %15 : vector<1x1x8x16x4xbf16> to vector<8x16x4xbf16>
    %17 = tpu.concatenate %12, %14, %16 in 2 : vector<8x16x4xbf16>, vector<8x16x4xbf16>, vector<8x16x4xbf16> -> vector<8x16x12xbf16>
    %18 = vector.shape_cast %17 : vector<8x16x12xbf16> to vector<128x12xbf16>
    %c1_30 = arith.constant 1 : index
    %c0_31 = arith.constant 0 : index
    %c0_32 = arith.constant 0 : index
    %19 = vector.load %arg4[%c1_30, %c0_31, %c0_32] : memref<3x12x8xbf16, #tpu.memory_space<vmem>>, vector<1x12x8xbf16>
    %20 = vector.shape_cast %19 : vector<1x12x8xbf16> to vector<12x8xbf16>
    %cst_33 = arith.constant dense<0.000000e+00> : vector<128x8xf32>
    %21 = tpu.matmul %18, %20, %cst_33 {dimension_numbers = #tpu.dot_dimension_numbers<[1], [0], [0], [1], [0, 0, 1, 1], [], []>} : vector<128x12xbf16>, vector<12x8xbf16>, vector<128x8xf32> -> vector<128x8xf32>
    %22 = arith.addf %10, %21 : vector<128x8xf32>
    %c0_34 = arith.constant 0 : index
    %c0_35 = arith.constant 0 : index
    %c2_36 = arith.constant 2 : index
    %c0_37 = arith.constant 0 : index
    %c0_38 = arith.constant 0 : index
    %23 = vector.load %arg3[%c0_34, %c0_35, %c2_36, %c0_37, %c0_38] : memref<1x1x10x18x4xbf16, #tpu.memory_space<vmem>>, vector<1x1x8x16x4xbf16>
    %24 = vector.shape_cast %23 : vector<1x1x8x16x4xbf16> to vector<8x16x4xbf16>
    %c0_39 = arith.constant 0 : index
    %c0_40 = arith.constant 0 : index
    %c2_41 = arith.constant 2 : index
    %c1_42 = arith.constant 1 : index
    %c0_43 = arith.constant 0 : index
    %25 = vector.load %arg3[%c0_39, %c0_40, %c2_41, %c1_42, %c0_43] : memref<1x1x10x18x4xbf16, #tpu.memory_space<vmem>>, vector<1x1x8x16x4xbf16>
    %26 = vector.shape_cast %25 : vector<1x1x8x16x4xbf16> to vector<8x16x4xbf16>
    %c0_44 = arith.constant 0 : index
    %c0_45 = arith.constant 0 : index
    %c2_46 = arith.constant 2 : index
    %c2_47 = arith.constant 2 : index
    %c0_48 = arith.constant 0 : index
    %27 = vector.load %arg3[%c0_44, %c0_45, %c2_46, %c2_47, %c0_48] : memref<1x1x10x18x4xbf16, #tpu.memory_space<vmem>>, vector<1x1x8x16x4xbf16>
    %28 = vector.shape_cast %27 : vector<1x1x8x16x4xbf16> to vector<8x16x4xbf16>
    %29 = tpu.concatenate %24, %26, %28 in 2 : vector<8x16x4xbf16>, vector<8x16x4xbf16>, vector<8x16x4xbf16> -> vector<8x16x12xbf16>
    %30 = vector.shape_cast %29 : vector<8x16x12xbf16> to vector<128x12xbf16>
    %c2_49 = arith.constant 2 : index
    %c0_50 = arith.constant 0 : index
    %c0_51 = arith.constant 0 : index
    %31 = vector.load %arg4[%c2_49, %c0_50, %c0_51] : memref<3x12x8xbf16, #tpu.memory_space<vmem>>, vector<1x12x8xbf16>
    %32 = vector.shape_cast %31 : vector<1x12x8xbf16> to vector<12x8xbf16>
    %cst_52 = arith.constant dense<0.000000e+00> : vector<128x8xf32>
    %33 = tpu.matmul %30, %32, %cst_52 {dimension_numbers = #tpu.dot_dimension_numbers<[1], [0], [0], [1], [0, 0, 1, 1], [], []>} : vector<128x12xbf16>, vector<12x8xbf16>, vector<128x8xf32> -> vector<128x8xf32>
    %34 = arith.addf %22, %33 : vector<128x8xf32>
    %c0_53 = arith.constant 0 : index
    %c0_54 = arith.constant 0 : index
    %35 = vector.load %arg5[%c0_53, %c0_54] : memref<1x8xf32, #tpu.memory_space<vmem>>, vector<1x8xf32>
    %36 = vector.broadcast %35 : vector<1x8xf32> to vector<128x8xf32>
    %37 = arith.addf %34, %36 : vector<128x8xf32>
    %cst_55 = arith.constant 0.000000e+00 : f32
    %38 = vector.broadcast %cst_55 : f32 to vector<128x8xf32>
    %39 = arith.maximumf %37, %38 : vector<128x8xf32>
    %40 = vector.shape_cast %39 : vector<128x8xf32> to vector<8x16x8xf32>
    %c0_56 = arith.constant 0 : index
    %c0_57 = arith.constant 0 : index
    %c0_58 = arith.constant 0 : index
    %c0_59 = arith.constant 0 : index
    %41 = vector.load %arg6[%c0_56, %c0_57, %c0_58, %c0_59] : memref<1x8x16x8xf32, #tpu.memory_space<vmem>>, vector<1x8x16x8xf32>
    %42 = vector.shape_cast %41 : vector<1x8x16x8xf32> to vector<8x16x8xf32>
    %43 = vector.shape_cast %40 : vector<8x16x8xf32> to vector<1x8x16x8xf32>
    tpu.vector_store %arg6[%c0_56, %c0_57, %c0_58, %c0_59], %43 {strides = array<i32>} : memref<1x8x16x8xf32, #tpu.memory_space<vmem>>, vector<1x8x16x8xf32>,
    return
  }
  func.func @transform_0(%arg0: i32, %arg1: i32, %arg2: i32) -> (i32, i32, i32, i32, i32) {
    %c0_i32 = arith.constant 0 : i32
    %c0_i32_0 = arith.constant 0 : i32
    %c0_i32_1 = arith.constant 0 : i32
    %c0_i32_2 = arith.constant 0 : i32
    return %arg1, %arg2, %c0_i32, %c0_i32_0, %c0_i32_1 : i32, i32, i32, i32, i32
  }
  func.func @transform_1(%arg0: i32, %arg1: i32, %arg2: i32) -> (i32, i32, i32) {
    %c0_i32 = arith.constant 0 : i32
    %c0_i32_0 = arith.constant 0 : i32
    %c0_i32_1 = arith.constant 0 : i32
    return %c0_i32, %c0_i32_0, %arg0 : i32, i32, i32
  }
  func.func @transform_2(%arg0: i32, %arg1: i32, %arg2: i32) -> (i32, i32) {
    %c0_i32 = arith.constant 0 : i32
    %c0_i32_0 = arith.constant 0 : i32
    return %c0_i32, %arg0 : i32, i32
  }
  func.func @transform_3(%arg0: i32, %arg1: i32, %arg2: i32) -> (i32, i32, i32, i32) {
    %c0_i32 = arith.constant 0 : i32
    %c0_i32_0 = arith.constant 0 : i32
    return %arg1, %arg2, %c0_i32, %arg0 : i32, i32, i32, i32
  }
}

</mosaic_0001>

<llo_original>
// kernel: tpu_custom_call.1
$region0: #{tpu_custom_call.1}
  #allocation0 [shape = 'u32[]', space=smem, size = 0x4, offset = 0x4, fixed_abs, tag = 'smem constant byte address 0x4 - core index']
  #allocation1 [shape = 'u32[144,128]{1,0:T(1,128)}', space=vmem, size = 0x12000, scoped, tag = 'internal scratch']
  %s0 = inlined_call_operand.vmem [shape: bf16[2,2,10,18,4], index: 0, kind: input, shape index: {}]
  %s1 = inlined_call_operand.vmem [shape: bf16[3,12,8], index: 1, kind: input, shape index: {}]
  %s2 = inlined_call_operand.vmem [shape: f32[1,8], index: 2, kind: input, shape index: {}]
  %s3 = inlined_call_operand.vmem [shape: f32[2,16,16,8], index: 3, kind: output, shape index: {}]
  %s4 = sld [smem:[#allocation0]]
  $region45: #{tpu_custom_call.1} parent=0
    _
  %s6 = ssub.s32 1, %s4
  %s7 = scalar_select 0, %s6, %s4
  loop: start=0, step=1, limit=6
  $region2: #{tpu_custom_call.1} parent=0 // loop_pre_header
    _
  $region3: #{tpu_custom_call.1} parent=0 // loop_header
    %s9 = sphi 0, %s13
    %p10 = scmp.ge.s32.totalorder %s9, 6
    %s16 = sphi 0, %s35
    %s17 = sphi 0, %s31
    %s18 = sphi 0, %s27
    %s19 = sphi 0, %s16
    %s20 = sphi 0, %s17
    %s21 = sphi 0, %s18
    %s22 = sphi 0, %s19
    %s23 = sphi 0, %s20
    %s24 = sphi 0, %s21
    %s40 = sphi 0, %s42
    %s43 = sphi 0, %s40
    %s44 = sphi 0, %s43
    %s60 = sphi 0, %s44
    %s66 = sphi 0, %s68
    %s69 = sphi 0, %s66
    %s70 = sphi 0, %s69
    %s86 = sphi 0, %s70
    %s92 = sphi 0, %s94
    %s95 = sphi 0, %s92
    %s96 = sphi 0, %s95
    %s112 = sphi 0, %s96
    %s122 = sphi 0, %s124
    %s125 = sphi 0, %s122
    %s126 = sphi 0, %s125
    %s142 = sphi 0, %s126
  $region4: #{tpu_custom_call.1} parent=0 // loop_header_branch
    %12 = sbr.rel (%p10) target = $region8
  $region5: #{tpu_custom_call.1} parent=0 // loop_body
    %s14 = ssub.s32 %s9, 1
    %s15 = ssub.s32 %s9, 2
    %s25 = sadd.s32 1, %s18
    %p26 = scmp.ge.s32.totalorder %s25, 2
    %s27 = scalar_select %p26, 0, %s25
    %s28 = sadd.s32 1, %s17
    %s29 = scalar_select %p26, %s28, %s17
    %p30 = scmp.ge.s32.totalorder %s29, 2
    %s31 = scalar_select %p30, 0, %s29
    %s32 = sadd.s32 1, %s16
    %s33 = scalar_select %p30, %s32, %s16
    %p34 = scmp.ge.s32.totalorder %s33, 1
    %s35 = scalar_select %p34, 0, %s33
    %s36 = ssub.s32 %s17, %s31
    %s37 = ssub.s32 %s18, %s27
    %s38 = sor.u32 %s36, %s37
    %p39 = scmp.eq.s32.totalorder %s38, 0
    %s41 = sadd.s32 %s40, 1
    %s42 = scalar_select %p39, %s40, %s41
    %p45 = pneg %p39
    %p46 = scmp.eq.s32.totalorder %s9, 3
    %p47 = por %p45, %p46
    %p48 = scmp.ne.s32.totalorder %s40, %s43
    %p49 = scmp.eq.s32.totalorder %s9, 0
    %p50 = por %p48, %p49
    %p51 = scmp.ne.s32.totalorder %s40, %s43
    %p52 = scmp.eq.s32.totalorder %s14, 3
    %p53 = por %p51, %p52
    %p54 = scmp.ne.s32.totalorder %s43, %s44
    %p55 = scmp.eq.s32.totalorder %s14, 0
    %p56 = por %p54, %p55
    %p57 = scmp.ne.s32.totalorder %s43, %s44
    %p58 = scmp.eq.s32.totalorder %s15, 3
    %p59 = por %p57, %p58
    %p61 = scmp.ne.s32.totalorder %s44, %s60
    %p62 = scmp.eq.s32.totalorder %s15, 0
    %p63 = por %p61, %p62
    %s64 = ssub.s32 %s16, %s35
    %p65 = scmp.eq.s32.totalorder %s64, 0
    %s67 = sadd.s32 %s66, 1
    %s68 = scalar_select %p65, %s66, %s67
    %p71 = pneg %p65
    %p72 = scmp.eq.s32.totalorder %s9, 3
    %p73 = por %p71, %p72
    %p74 = scmp.ne.s32.totalorder %s66, %s69
    %p75 = scmp.eq.s32.totalorder %s9, 0
    %p76 = por %p74, %p75
    %p77 = scmp.ne.s32.totalorder %s66, %s69
    %p78 = scmp.eq.s32.totalorder %s14, 3
    %p79 = por %p77, %p78
    %p80 = scmp.ne.s32.totalorder %s69, %s70
    %p81 = scmp.eq.s32.totalorder %s14, 0
    %p82 = por %p80, %p81
    %p83 = scmp.ne.s32.totalorder %s69, %s70
    %p84 = scmp.eq.s32.totalorder %s15, 3
    %p85 = por %p83, %p84
    %p87 = scmp.ne.s32.totalorder %s70, %s86
    %p88 = scmp.eq.s32.totalorder %s15, 0
    %p89 = por %p87, %p88
    %s90 = ssub.s32 %s16, %s35
    %p91 = scmp.eq.s32.totalorder %s90, 0
    %s93 = sadd.s32 %s92, 1
    %s94 = scalar_select %p91, %s92, %s93
    %p97 = pneg %p91
    %p98 = scmp.eq.s32.totalorder %s9, 3
    %p99 = por %p97, %p98
    %p100 = scmp.ne.s32.totalorder %s92, %s95
    %p101 = scmp.eq.s32.totalorder %s9, 0
    %p102 = por %p100, %p101
    %p103 = scmp.ne.s32.totalorder %s92, %s95
    %p104 = scmp.eq.s32.totalorder %s14, 3
    %p105 = por %p103, %p104
    %p106 = scmp.ne.s32.totalorder %s95, %s96
    %p107 = scmp.eq.s32.totalorder %s14, 0
    %p108 = por %p106, %p107
    %p109 = scmp.ne.s32.totalorder %s95, %s96
    %p110 = scmp.eq.s32.totalorder %s15, 3
    %p111 = por %p109, %p110
    %p113 = scmp.ne.s32.totalorder %s96, %s112
    %p114 = scmp.eq.s32.totalorder %s15, 0
    %p115 = por %p113, %p114
    %s116 = ssub.s32 %s17, %s31
    %s117 = ssub.s32 %s18, %s27
    %s118 = sor.u32 %s116, %s117
    %s119 = ssub.s32 %s16, %s35
    %s120 = sor.u32 %s118, %s119
    %p121 = scmp.eq.s32.totalorder %s120, 0
    %s123 = sadd.s32 %s122, 1
    %s124 = scalar_select %p121, %s122, %s123
    %p127 = pneg %p121
    %p128 = scmp.eq.s32.totalorder %s9, 3
    %p129 = por %p127, %p128
    %p130 = scmp.ne.s32.totalorder %s122, %s125
    %p131 = scmp.eq.s32.totalorder %s9, 0
    %p132 = por %p130, %p131
    %p133 = scmp.ne.s32.totalorder %s122, %s125
    %p134 = scmp.eq.s32.totalorder %s14, 3
    %p135 = por %p133, %p134
    %p136 = scmp.ne.s32.totalorder %s125, %s126
    %p137 = scmp.eq.s32.totalorder %s14, 0
    %p138 = por %p136, %p137
    %p139 = scmp.ne.s32.totalorder %s125, %s126
    %p140 = scmp.eq.s32.totalorder %s15, 3
    %p141 = por %p139, %p140
    %p143 = scmp.ne.s32.totalorder %s126, %s142
    %p144 = scmp.eq.s32.totalorder %s15, 0
    %p145 = por %p143, %p144
    %p146 = scmp.le.s32.totalorder 1, %s9
    %p147 = scmp.lt.s32.totalorder %s9, 5
    %p148 = pnand %p146, %p147
    %p149 = pneg %p148
    // Predicated region
    $region9: #{tpu_custom_call.1} parent=5 // pred_check
      _
    $region10: #{tpu_custom_call.1} parent=5 // pred_check_branch
      %151 = sbr.rel (%p148) target = $region12
    $region11: #{tpu_custom_call.1} parent=5 // pred_region
      %s152 = ssub.s32 %s9, 1
      // Predicated region
      $region13: #{tpu_custom_call.1} parent=11 // pred_check
        %p153 = pneg %p82
      $region14: #{tpu_custom_call.1} parent=11 // pred_check_branch
        %155 = sbr.rel (%p153) target = $region16
      $region15: #{tpu_custom_call.1} parent=11 // pred_region
        %p156 = scmp.lt.s32.totalorder %s19, 0
        %s157 = scalar_select %p156, %s19, 0
        %s158 = smul.addr %s157, 4
        %s159 = scalar_lea.vmem %s1, %s158
      $region16: #{tpu_custom_call.1} parent=11 // pred_fallthru
        _
      // Predicated region
      $region17: #{tpu_custom_call.1} parent=11 // pred_check
        %p160 = pneg %p108
      $region18: #{tpu_custom_call.1} parent=11 // pred_check_branch
        %162 = sbr.rel (%p160) target = $region20
      $region19: #{tpu_custom_call.1} parent=11 // pred_region
        %p163 = scmp.lt.s32.totalorder %s19, 0
        %s164 = scalar_select %p163, %s19, 0
        %s165 = scalar_lea.vmem %s2, %s164
      $region20: #{tpu_custom_call.1} parent=11 // pred_fallthru
        _
    $region12: #{tpu_custom_call.1} parent=5 // pred_fallthru
      _
    %p166 = scmp.lt.s32.totalorder %s9, 4
    // Predicated region
    $region21: #{tpu_custom_call.1} parent=5 // pred_check
      %p167 = pneg %p166
    $region22: #{tpu_custom_call.1} parent=5 // pred_check_branch
      %169 = sbr.rel (%p167) target = $region24
    $region23: #{tpu_custom_call.1} parent=5 // pred_region
      // Predicated region
      $region25: #{tpu_custom_call.1} parent=23 // pred_check
        %p170 = pneg %p50
      $region26: #{tpu_custom_call.1} parent=23 // pred_check_branch
        %172 = sbr.rel (%p170) target = $region28
      $region27: #{tpu_custom_call.1} parent=23 // pred_region
        %p173 = scmp.lt.s32.totalorder %s17, 1
        %s174 = scalar_select %p173, %s17, 1
        %p175 = scmp.lt.s32.totalorder %s18, 1
        %s176 = scalar_select %p175, %s18, 1
        %s177 = smul.addr %s176, 30
        %s178 = smul.addr %s174, 60
        %s179 = sadd.s32 %s177, %s178
        %s180 = smul.addr %s179, 4
        %s181 = scalar_lea.vmem %s0, %s180
      $region28: #{tpu_custom_call.1} parent=23 // pred_fallthru
        _
    $region24: #{tpu_custom_call.1} parent=5 // pred_fallthru
      _
    %p182 = scmp.le.s32.totalorder 1, %s9
    %p183 = scmp.lt.s32.totalorder %s9, 5
    %p184 = pnand %p182, %p183
    %p185 = pneg %p184
    // Predicated region
    $region29: #{tpu_custom_call.1} parent=5 // pred_check
      _
    $region30: #{tpu_custom_call.1} parent=5 // pred_check_branch
      %187 = sbr.rel (%p184) target = $region32
    $region31: #{tpu_custom_call.1} parent=5 // pred_region
      %s188 = ssub.s32 %s9, 1
      %p189 = scmp.lt.s32.totalorder %s20, 1
      %s190 = scalar_select %p189, %s20, 1
      %p191 = scmp.lt.s32.totalorder %s21, 1
      %s192 = scalar_select %p191, %s21, 1
      %s193 = smul.addr %s192, 30
      %s194 = smul.addr %s190, 60
      %s195 = sadd.s32 %s193, %s194
      %s196 = smul.addr %s195, 4
      %s197 = scalar_lea.vmem %s0, %s196
      %p198 = pneg %p56
      %p199 = pneg %p53
      %p200 = scmp.lt.s32.totalorder %s19, 0
      %s201 = scalar_select %p200, %s19, 0
      %s202 = smul.addr %s201, 4
      %s203 = scalar_lea.vmem %s1, %s202
      %p204 = pneg %p82
      %p205 = pneg %p79
      %p206 = scmp.lt.s32.totalorder %s19, 0
      %s207 = scalar_select %p206, %s19, 0
      %s208 = scalar_lea.vmem %s2, %s207
      %p209 = pneg %p108
      %p210 = pneg %p105
      %p211 = pneg %p138
      %p212 = pneg %p135
      %s213 = smul.u32 8, %s21
      %p214 = scmp.lt.s32.totalorder %s20, 1
      %s215 = scalar_select %p214, %s20, 1
      %p216 = scmp.lt.s32.totalorder %s213, 15
      %s217 = scalar_select %p216, %s213, 15
      %p218 = scmp.lt.s32.totalorder %s19, 0
      %s219 = scalar_select %p218, %s19, 0
      %s220 = smul.addr %s217, 2
      %s221 = sadd.s32 %s219, %s220
      %s222 = smul.addr %s215, 32
      %s223 = sadd.s32 %s221, %s222
      %s224 = smul.addr %s223, 8
      %s225 = scalar_lea.vmem %s3, %s224
      %p226 = scmp.lt.s32.totalorder %s20, 1
      %s227 = scalar_select %p226, %s20, 1
      %p228 = scmp.lt.s32.totalorder %s21, 1
      %s229 = scalar_select %p228, %s21, 1
      %s230 = smul.addr %s229, 30
      %s231 = smul.addr %s227, 60
      %s232 = sadd.s32 %s230, %s231
      %s233 = smul.addr %s232, 4
      %s234 = scalar_lea.vmem %s0, %s233
      %p235 = scmp.lt.s32.totalorder %s19, 0
      %s236 = scalar_select %p235, %s19, 0
      %s237 = smul.addr %s236, 4
      %s238 = scalar_lea.vmem %s1, %s237
      %p239 = scmp.lt.s32.totalorder %s19, 0
      %s240 = scalar_select %p239, %s19, 0
      %s241 = scalar_lea.vmem %s2, %s240
      %s242 = smul.u32 8, %s21
      %p243 = scmp.lt.s32.totalorder %s20, 1
      %s244 = scalar_select %p243, %s20, 1
      %p245 = scmp.lt.s32.totalorder %s242, 15
      %s246 = scalar_select %p245, %s242, 15
      %p247 = scmp.lt.s32.totalorder %s19, 0
      %s248 = scalar_select %p247, %s19, 0
      %s249 = smul.addr %s246, 2
      %s250 = sadd.s32 %s248, %s249
      %s251 = smul.addr %s244, 32
      %s252 = sadd.s32 %s250, %s251
      %s253 = smul.addr %s252, 8
      %s254 = scalar_lea.vmem %s3, %s253
      %s255 = smul.u32 8, %s21
      %v257 = vld [vmem:[%s234] sm:$0xf]
      %v258 = vld [vmem:[%s234 + $0x4] sm:$0xf]
      %v259 = vld [vmem:[%s234 + $0xc] sm:$0xf]
      %v260 = vld [vmem:[%s234 + $0x10] sm:$0xf]
      %v261 = vld [vmem:[%s234 + $0x18] sm:$0xf]
      %v262 = vld [vmem:[%s234 + $0x1c] sm:$0xf]
      %v263 = vld [vmem:[%s234 + $0x24] sm:$0xf]
      %v264 = vld [vmem:[%s234 + $0x28] sm:$0xf]
      %v265 = vld [vmem:[%s234 + $0x30] sm:$0xf]
      %v266 = vld [vmem:[%s234 + $0x34] sm:$0xf]
      %v267 = vld [vmem:[%s234 + $0x3c] sm:$0xf]
      %v268 = vld [vmem:[%s234 + $0x40] sm:$0xf]
      %v269 = vld [vmem:[%s234 + $0x48] sm:$0xf]
      %v270 = vld [vmem:[%s234 + $0x4c] sm:$0xf]
      %v271 = vld [vmem:[%s234 + $0x54] sm:$0xf]
      %v272 = vld [vmem:[%s234 + $0x58] sm:$0xf]
      %v273 = vld [vmem:[%s234 + $0x8] sm:$0x1]
      %v274 = vld [vmem:[%s234 + $0x14] sm:$0x1]
      %v275 = vld [vmem:[%s234 + $0x20] sm:$0x1]
      %v276 = vld [vmem:[%s234 + $0x2c] sm:$0x1]
      %v277 = vld [vmem:[%s234 + $0x38] sm:$0x1]
      %v278 = vld [vmem:[%s234 + $0x44] sm:$0x1]
      %v279 = vld [vmem:[%s234 + $0x50] sm:$0x1]
      %v280 = vld [vmem:[%s234 + $0x5c] sm:$0x1]
      %v281 = vld [vmem:[%s234] sm:$0xe]
      %v282 = vld [vmem:[%s234 + $0xc] sm:$0xe]
      %v283 = vld [vmem:[%s234 + $0x18] sm:$0xe]
      %v284 = vld [vmem:[%s234 + $0x24] sm:$0xe]
      %v285 = vld [vmem:[%s234 + $0x30] sm:$0xe]
      %v286 = vld [vmem:[%s234 + $0x3c] sm:$0xe]
      %v287 = vld [vmem:[%s234 + $0x48] sm:$0xe]
      %v288 = vld [vmem:[%s234 + $0x54] sm:$0xe]
      %v305 = vunpack.c.l.b16 %v257
      %v306 = vunpack.c.l.b16 %v258
      %v307 = vunpack.c.l.b16 %v259
      %v308 = vunpack.c.l.b16 %v260
      %v309 = vunpack.c.l.b16 %v261
      %v310 = vunpack.c.l.b16 %v262
      %v311 = vunpack.c.l.b16 %v263
      %v312 = vunpack.c.l.b16 %v264
      %v313 = vunpack.c.l.b16 %v265
      %v314 = vunpack.c.l.b16 %v266
      %v315 = vunpack.c.l.b16 %v267
      %v316 = vunpack.c.l.b16 %v268
      %v317 = vunpack.c.l.b16 %v269
      %v318 = vunpack.c.l.b16 %v270
      %v319 = vunpack.c.l.b16 %v271
      %v320 = vunpack.c.l.b16 %v272
      %v321 = vpack.c.b16 %v306, %v305
      %v322 = vpack.c.b16 %v308, %v307
      %v323 = vpack.c.b16 %v310, %v309
      %v324 = vpack.c.b16 %v312, %v311
      %v325 = vpack.c.b16 %v314, %v313
      %v326 = vpack.c.b16 %v316, %v315
      %v327 = vpack.c.b16 %v318, %v317
      %v328 = vpack.c.b16 %v320, %v319
      %v337 = vunpack.c.l.b16 %v273
      %v338 = vunpack.c.l.b16 %v274
      %v339 = vunpack.c.l.b16 %v275
      %v340 = vunpack.c.l.b16 %v276
      %v341 = vunpack.c.l.b16 %v277
      %v342 = vunpack.c.l.b16 %v278
      %v343 = vunpack.c.l.b16 %v279
      %v344 = vunpack.c.l.b16 %v280
      %v345 = vpack.c.b16 %v337, %v337
      %v346 = vpack.c.b16 %v338, %v338
      %v347 = vpack.c.b16 %v339, %v339
      %v348 = vpack.c.b16 %v340, %v340
      %v349 = vpack.c.b16 %v341, %v341
      %v350 = vpack.c.b16 %v342, %v342
      %v351 = vpack.c.b16 %v343, %v343
      %v352 = vpack.c.b16 %v344, %v344
      %vm353 = vsmask.f32 7424
      %v355 = vshrl.u32 %v321, 16
      %v357 = vshll.u32 %v321, 16
      %v359 = vrot.slane %v357, 1
      %v360 = vor.u32 %v355, %v359
      %v362 = vshll.u32 %v345, 16
      %v364 = vrot.slane %v362, 1
      %v365 = vsel %vm353, %v360, %v364
      %v367 = vshrl.u32 %v322, 16
      %v369 = vshll.u32 %v322, 16
      %v371 = vrot.slane %v369, 1
      %v372 = vor.u32 %v367, %v371
      %v374 = vshll.u32 %v346, 16
      %v376 = vrot.slane %v374, 1
      %v377 = vsel %vm353, %v372, %v376
      %v379 = vshrl.u32 %v323, 16
      %v381 = vshll.u32 %v323, 16
      %v383 = vrot.slane %v381, 1
      %v384 = vor.u32 %v379, %v383
      %v386 = vshll.u32 %v347, 16
      %v388 = vrot.slane %v386, 1
      %v389 = vsel %vm353, %v384, %v388
      %v391 = vshrl.u32 %v324, 16
      %v393 = vshll.u32 %v324, 16
      %v395 = vrot.slane %v393, 1
      %v396 = vor.u32 %v391, %v395
      %v398 = vshll.u32 %v348, 16
      %v400 = vrot.slane %v398, 1
      %v401 = vsel %vm353, %v396, %v400
      %v403 = vshrl.u32 %v325, 16
      %v405 = vshll.u32 %v325, 16
      %v407 = vrot.slane %v405, 1
      %v408 = vor.u32 %v403, %v407
      %v410 = vshll.u32 %v349, 16
      %v412 = vrot.slane %v410, 1
      %v413 = vsel %vm353, %v408, %v412
      %v415 = vshrl.u32 %v326, 16
      %v417 = vshll.u32 %v326, 16
      %v419 = vrot.slane %v417, 1
      %v420 = vor.u32 %v415, %v419
      %v422 = vshll.u32 %v350, 16
      %v424 = vrot.slane %v422, 1
      %v425 = vsel %vm353, %v420, %v424
      %v427 = vshrl.u32 %v327, 16
      %v429 = vshll.u32 %v327, 16
      %v431 = vrot.slane %v429, 1
      %v432 = vor.u32 %v427, %v431
      %v434 = vshll.u32 %v351, 16
      %v436 = vrot.slane %v434, 1
      %v437 = vsel %vm353, %v432, %v436
      %v439 = vshrl.u32 %v328, 16
      %v441 = vshll.u32 %v328, 16
      %v443 = vrot.slane %v441, 1
      %v444 = vor.u32 %v439, %v443
      %v446 = vshll.u32 %v352, 16
      %v448 = vrot.slane %v446, 1
      %v449 = vsel %vm353, %v444, %v448
      %450 = vrot.lane.b32.xlu0 %v365, 4
      %v451 = vpop.permute.xlu0 %450
      %452 = vrot.lane.b32.xlu0 %v377, 4
      %v453 = vpop.permute.xlu0 %452
      %454 = vrot.lane.b32.xlu0 %v389, 4
      %v455 = vpop.permute.xlu0 %454
      %456 = vrot.lane.b32.xlu0 %v401, 4
      %v457 = vpop.permute.xlu0 %456
      %458 = vrot.lane.b32.xlu0 %v413, 4
      %v459 = vpop.permute.xlu0 %458
      %460 = vrot.lane.b32.xlu0 %v425, 4
      %v461 = vpop.permute.xlu0 %460
      %462 = vrot.lane.b32.xlu0 %v437, 4
      %v463 = vpop.permute.xlu0 %462
      %464 = vrot.lane.b32.xlu0 %v449, 4
      %v465 = vpop.permute.xlu0 %464
      %v474 = vunpack.c.l.b16 %v281
      %v475 = vunpack.c.l.b16 %v282
      %v476 = vunpack.c.l.b16 %v283
      %v477 = vunpack.c.l.b16 %v284
      %v478 = vunpack.c.l.b16 %v285
      %v479 = vunpack.c.l.b16 %v286
      %v480 = vunpack.c.l.b16 %v287
      %v481 = vunpack.c.l.b16 %v288
      %v482 = vpack.c.b16 %v306, %v474
      %v483 = vpack.c.b16 %v308, %v475
      %v484 = vpack.c.b16 %v310, %v476
      %v485 = vpack.c.b16 %v312, %v477
      %v486 = vpack.c.b16 %v314, %v478
      %v487 = vpack.c.b16 %v316, %v479
      %v488 = vpack.c.b16 %v318, %v480
      %v489 = vpack.c.b16 %v320, %v481
      %vm490 = vcmask 1046528
      %v491 = vrot.slane %v482, 1
      %v492 = vrot.slane %v345, 1
      %v493 = vsel %vm490, %v491, %v492
      %v494 = vrot.slane %v483, 1
      %v495 = vrot.slane %v346, 1
      %v496 = vsel %vm490, %v494, %v495
      %v497 = vrot.slane %v484, 1
      %v498 = vrot.slane %v347, 1
      %v499 = vsel %vm490, %v497, %v498
      %v500 = vrot.slane %v485, 1
      %v501 = vrot.slane %v348, 1
      %v502 = vsel %vm490, %v500, %v501
      %v503 = vrot.slane %v486, 1
      %v504 = vrot.slane %v349, 1
      %v505 = vsel %vm490, %v503, %v504
      %v506 = vrot.slane %v487, 1
      %v507 = vrot.slane %v350, 1
      %v508 = vsel %vm490, %v506, %v507
      %v509 = vrot.slane %v488, 1
      %v510 = vrot.slane %v351, 1
      %v511 = vsel %vm490, %v509, %v510
      %v512 = vrot.slane %v489, 1
      %v513 = vrot.slane %v352, 1
      %v514 = vsel %vm490, %v512, %v513
      %515 = vrot.lane.b32.xlu0 %v493, 8
      %v516 = vpop.permute.xlu0 %515
      %517 = vrot.lane.b32.xlu0 %v496, 8
      %v518 = vpop.permute.xlu0 %517
      %519 = vrot.lane.b32.xlu0 %v499, 8
      %v520 = vpop.permute.xlu0 %519
      %521 = vrot.lane.b32.xlu0 %v502, 8
      %v522 = vpop.permute.xlu0 %521
      %523 = vrot.lane.b32.xlu0 %v505, 8
      %v524 = vpop.permute.xlu0 %523
      %525 = vrot.lane.b32.xlu0 %v508, 8
      %v526 = vpop.permute.xlu0 %525
      %527 = vrot.lane.b32.xlu0 %v511, 8
      %v528 = vpop.permute.xlu0 %527
      %529 = vrot.lane.b32.xlu0 %v514, 8
      %v530 = vpop.permute.xlu0 %529
      %vm531 = vcmask 31744
      %v533 = vsel %vm531, %v321, %v451
      %v535 = vsel %vm531, %v322, %v453
      %v537 = vsel %vm531, %v323, %v455
      %v539 = vsel %vm531, %v324, %v457
      %v541 = vsel %vm531, %v325, %v459
      %v543 = vsel %vm531, %v326, %v461
      %v545 = vsel %vm531, %v327, %v463
      %v547 = vsel %vm531, %v328, %v465
      %vm548 = vcmask 64512
      %v550 = vsel %vm548, %v533, %v516
      %v552 = vsel %vm548, %v535, %v518
      %v554 = vsel %vm548, %v537, %v520
      %v556 = vsel %vm548, %v539, %v522
      %v558 = vsel %vm548, %v541, %v524
      %v560 = vsel %vm548, %v543, %v526
      %v562 = vsel %vm548, %v545, %v528
      %v564 = vsel %vm548, %v547, %v530
      %v565 = vld [vmem:[%s238] sm:$0xf]
      %v566 = vld [vmem:[%s238 + $0x4] sm:$0x3]
      %s567 = scalar_lea.vmem %s234, 12
      %v568 = vld [vmem:[%s567] sm:$0xf]
      %v569 = vld [vmem:[%s567 + $0x4] sm:$0xf]
      %v570 = vld [vmem:[%s567 + $0xc] sm:$0xf]
      %v571 = vld [vmem:[%s567 + $0x10] sm:$0xf]
      %v572 = vld [vmem:[%s567 + $0x18] sm:$0xf]
      %v573 = vld [vmem:[%s567 + $0x1c] sm:$0xf]
      %v574 = vld [vmem:[%s567 + $0x24] sm:$0xf]
      %v575 = vld [vmem:[%s567 + $0x28] sm:$0xf]
      %v576 = vld [vmem:[%s567 + $0x30] sm:$0xf]
      %v577 = vld [vmem:[%s567 + $0x34] sm:$0xf]
      %v578 = vld [vmem:[%s567 + $0x3c] sm:$0xf]
      %v579 = vld [vmem:[%s567 + $0x40] sm:$0xf]
      %v580 = vld [vmem:[%s567 + $0x48] sm:$0xf]
      %v581 = vld [vmem:[%s567 + $0x4c] sm:$0xf]
      %v582 = vld [vmem:[%s567 + $0x54] sm:$0xf]
      %v583 = vld [vmem:[%s567 + $0x58] sm:$0xf]
      %v584 = vld [vmem:[%s567 + $0x8] sm:$0x1]
      %v585 = vld [vmem:[%s567 + $0x14] sm:$0x1]
      %v586 = vld [vmem:[%s567 + $0x20] sm:$0x1]
      %v587 = vld [vmem:[%s567 + $0x2c] sm:$0x1]
      %v588 = vld [vmem:[%s567 + $0x38] sm:$0x1]
      %v589 = vld [vmem:[%s567 + $0x44] sm:$0x1]
      %v590 = vld [vmem:[%s567 + $0x50] sm:$0x1]
      %v591 = vld [vmem:[%s567 + $0x5c] sm:$0x1]
      %v592 = vld [vmem:[%s567] sm:$0xe]
      %v593 = vld [vmem:[%s567 + $0xc] sm:$0xe]
      %v594 = vld [vmem:[%s567 + $0x18] sm:$0xe]
      %v595 = vld [vmem:[%s567 + $0x24] sm:$0xe]
      %v596 = vld [vmem:[%s567 + $0x30] sm:$0xe]
      %v597 = vld [vmem:[%s567 + $0x3c] sm:$0xe]
      %v598 = vld [vmem:[%s567 + $0x48] sm:$0xe]
      %v599 = vld [vmem:[%s567 + $0x54] sm:$0xe]
      %v616 = vunpack.c.l.b16 %v568
      %v617 = vunpack.c.l.b16 %v569
      %v618 = vunpack.c.l.b16 %v570
      %v619 = vunpack.c.l.b16 %v571
      %v620 = vunpack.c.l.b16 %v572
      %v621 = vunpack.c.l.b16 %v573
      %v622 = vunpack.c.l.b16 %v574
      %v623 = vunpack.c.l.b16 %v575
      %v624 = vunpack.c.l.b16 %v576
      %v625 = vunpack.c.l.b16 %v577
      %v626 = vunpack.c.l.b16 %v578
      %v627 = vunpack.c.l.b16 %v579
      %v628 = vunpack.c.l.b16 %v580
      %v629 = vunpack.c.l.b16 %v581
      %v630 = vunpack.c.l.b16 %v582
      %v631 = vunpack.c.l.b16 %v583
      %v632 = vpack.c.b16 %v617, %v616
      %v633 = vpack.c.b16 %v619, %v618
      %v634 = vpack.c.b16 %v621, %v620
      %v635 = vpack.c.b16 %v623, %v622
      %v636 = vpack.c.b16 %v625, %v624
      %v637 = vpack.c.b16 %v627, %v626
      %v638 = vpack.c.b16 %v629, %v628
      %v639 = vpack.c.b16 %v631, %v630
      %v648 = vunpack.c.l.b16 %v584
      %v649 = vunpack.c.l.b16 %v585
      %v650 = vunpack.c.l.b16 %v586
      %v651 = vunpack.c.l.b16 %v587
      %v652 = vunpack.c.l.b16 %v588
      %v653 = vunpack.c.l.b16 %v589
      %v654 = vunpack.c.l.b16 %v590
      %v655 = vunpack.c.l.b16 %v591
      %v656 = vpack.c.b16 %v648, %v648
      %v657 = vpack.c.b16 %v649, %v649
      %v658 = vpack.c.b16 %v650, %v650
      %v659 = vpack.c.b16 %v651, %v651
      %v660 = vpack.c.b16 %v652, %v652
      %v661 = vpack.c.b16 %v653, %v653
      %v662 = vpack.c.b16 %v654, %v654
      %v663 = vpack.c.b16 %v655, %v655
      %v665 = vshrl.u32 %v632, 16
      %v667 = vshll.u32 %v632, 16
      %v669 = vrot.slane %v667, 1
      %v670 = vor.u32 %v665, %v669
      %v672 = vshll.u32 %v656, 16
      %v674 = vrot.slane %v672, 1
      %v675 = vsel %vm353, %v670, %v674
      %v677 = vshrl.u32 %v633, 16
      %v679 = vshll.u32 %v633, 16
      %v681 = vrot.slane %v679, 1
      %v682 = vor.u32 %v677, %v681
      %v684 = vshll.u32 %v657, 16
      %v686 = vrot.slane %v684, 1
      %v687 = vsel %vm353, %v682, %v686
      %v689 = vshrl.u32 %v634, 16
      %v691 = vshll.u32 %v634, 16
      %v693 = vrot.slane %v691, 1
      %v694 = vor.u32 %v689, %v693
      %v696 = vshll.u32 %v658, 16
      %v698 = vrot.slane %v696, 1
      %v699 = vsel %vm353, %v694, %v698
      %v701 = vshrl.u32 %v635, 16
      %v703 = vshll.u32 %v635, 16
      %v705 = vrot.slane %v703, 1
      %v706 = vor.u32 %v701, %v705
      %v708 = vshll.u32 %v659, 16
      %v710 = vrot.slane %v708, 1
      %v711 = vsel %vm353, %v706, %v710
      %v713 = vshrl.u32 %v636, 16
      %v715 = vshll.u32 %v636, 16
      %v717 = vrot.slane %v715, 1
      %v718 = vor.u32 %v713, %v717
      %v720 = vshll.u32 %v660, 16
      %v722 = vrot.slane %v720, 1
      %v723 = vsel %vm353, %v718, %v722
      %v725 = vshrl.u32 %v637, 16
      %v727 = vshll.u32 %v637, 16
      %v729 = vrot.slane %v727, 1
      %v730 = vor.u32 %v725, %v729
      %v732 = vshll.u32 %v661, 16
      %v734 = vrot.slane %v732, 1
      %v735 = vsel %vm353, %v730, %v734
      %v737 = vshrl.u32 %v638, 16
      %v739 = vshll.u32 %v638, 16
      %v741 = vrot.slane %v739, 1
      %v742 = vor.u32 %v737, %v741
      %v744 = vshll.u32 %v662, 16
      %v746 = vrot.slane %v744, 1
      %v747 = vsel %vm353, %v742, %v746
      %v749 = vshrl.u32 %v639, 16
      %v751 = vshll.u32 %v639, 16
      %v753 = vrot.slane %v751, 1
      %v754 = vor.u32 %v749, %v753
      %v756 = vshll.u32 %v663, 16
      %v758 = vrot.slane %v756, 1
      %v759 = vsel %vm353, %v754, %v758
      %760 = vrot.lane.b32.xlu0 %v675, 4
      %v761 = vpop.permute.xlu0 %760
      %762 = vrot.lane.b32.xlu0 %v687, 4
      %v763 = vpop.permute.xlu0 %762
      %764 = vrot.lane.b32.xlu0 %v699, 4
      %v765 = vpop.permute.xlu0 %764
      %766 = vrot.lane.b32.xlu0 %v711, 4
      %v767 = vpop.permute.xlu0 %766
      %768 = vrot.lane.b32.xlu0 %v723, 4
      %v769 = vpop.permute.xlu0 %768
      %770 = vrot.lane.b32.xlu0 %v735, 4
      %v771 = vpop.permute.xlu0 %770
      %772 = vrot.lane.b32.xlu0 %v747, 4
      %v773 = vpop.permute.xlu0 %772
      %774 = vrot.lane.b32.xlu0 %v759, 4
      %v775 = vpop.permute.xlu0 %774
      %v784 = vunpack.c.l.b16 %v592
      %v785 = vunpack.c.l.b16 %v593
      %v786 = vunpack.c.l.b16 %v594
      %v787 = vunpack.c.l.b16 %v595
      %v788 = vunpack.c.l.b16 %v596
      %v789 = vunpack.c.l.b16 %v597
      %v790 = vunpack.c.l.b16 %v598
      %v791 = vunpack.c.l.b16 %v599
      %v792 = vpack.c.b16 %v617, %v784
      %v793 = vpack.c.b16 %v619, %v785
      %v794 = vpack.c.b16 %v621, %v786
      %v795 = vpack.c.b16 %v623, %v787
      %v796 = vpack.c.b16 %v625, %v788
      %v797 = vpack.c.b16 %v627, %v789
      %v798 = vpack.c.b16 %v629, %v790
      %v799 = vpack.c.b16 %v631, %v791
      %v800 = vrot.slane %v792, 1
      %v801 = vrot.slane %v656, 1
      %v802 = vsel %vm490, %v800, %v801
      %v803 = vrot.slane %v793, 1
      %v804 = vrot.slane %v657, 1
      %v805 = vsel %vm490, %v803, %v804
      %v806 = vrot.slane %v794, 1
      %v807 = vrot.slane %v658, 1
      %v808 = vsel %vm490, %v806, %v807
      %v809 = vrot.slane %v795, 1
      %v810 = vrot.slane %v659, 1
      %v811 = vsel %vm490, %v809, %v810
      %v812 = vrot.slane %v796, 1
      %v813 = vrot.slane %v660, 1
      %v814 = vsel %vm490, %v812, %v813
      %v815 = vrot.slane %v797, 1
      %v816 = vrot.slane %v661, 1
      %v817 = vsel %vm490, %v815, %v816
      %v818 = vrot.slane %v798, 1
      %v819 = vrot.slane %v662, 1
      %v820 = vsel %vm490, %v818, %v819
      %v821 = vrot.slane %v799, 1
      %v822 = vrot.slane %v663, 1
      %v823 = vsel %vm490, %v821, %v822
      %824 = vrot.lane.b32.xlu0 %v802, 8
      %v825 = vpop.permute.xlu0 %824
      %826 = vrot.lane.b32.xlu0 %v805, 8
      %v827 = vpop.permute.xlu0 %826
      %828 = vrot.lane.b32.xlu0 %v808, 8
      %v829 = vpop.permute.xlu0 %828
      %830 = vrot.lane.b32.xlu0 %v811, 8
      %v831 = vpop.permute.xlu0 %830
      %832 = vrot.lane.b32.xlu0 %v814, 8
      %v833 = vpop.permute.xlu0 %832
      %834 = vrot.lane.b32.xlu0 %v817, 8
      %v835 = vpop.permute.xlu0 %834
      %836 = vrot.lane.b32.xlu0 %v820, 8
      %v837 = vpop.permute.xlu0 %836
      %838 = vrot.lane.b32.xlu0 %v823, 8
      %v839 = vpop.permute.xlu0 %838
      %v841 = vsel %vm531, %v632, %v761
      %v843 = vsel %vm531, %v633, %v763
      %v845 = vsel %vm531, %v634, %v765
      %v847 = vsel %vm531, %v635, %v767
      %v849 = vsel %vm531, %v636, %v769
      %v851 = vsel %vm531, %v637, %v771
      %v853 = vsel %vm531, %v638, %v773
      %v855 = vsel %vm531, %v639, %v775
      %v857 = vsel %vm548, %v841, %v825
      %v859 = vsel %vm548, %v843, %v827
      %v861 = vsel %vm548, %v845, %v829
      %v863 = vsel %vm548, %v847, %v831
      %v865 = vsel %vm548, %v849, %v833
      %v867 = vsel %vm548, %v851, %v835
      %v869 = vsel %vm548, %v853, %v837
      %v871 = vsel %vm548, %v855, %v839
      %s872 = scalar_lea.vmem %s238, 8
      %v873 = vld [vmem:[%s872] sm:$0xf]
      %v874 = vld [vmem:[%s872 + $0x4] sm:$0x3]
      %v877 = vunpack.c.l.b16 %v873
      %v878 = vunpack.c.l.b16 %v874
      %v879 = vpack.c.b16 %v878, %v877
      %vm880 = vcmask 97280
      %v881 = vsel %vm880, %v857, 0
      %v883 = vsel %vm880, %v859, 0
      %v885 = vsel %vm880, %v861, 0
      %v887 = vsel %vm880, %v863, 0
      %v889 = vsel %vm880, %v865, 0
      %v891 = vsel %vm880, %v867, 0
      %v893 = vsel %vm880, %v869, 0
      %v895 = vsel %vm880, %v871, 0
      %vm897 = vcmask 1045504
      %v899 = vsel %vm897, %v879, 0
      %901 = vmatprep.subr.bf16.mxu0 0
      %902 = vmatpush1.bf16.msra.mxu0 %v899
      %903 = vmatprep.subr.bf16.mxu0 0
      %904 = vmatpush1.bf16.msra.mxu0 0
      %905 = vmatprep.subr.bf16.mxu0 0
      %906 = vmatpush1.bf16.msra.mxu0 0
      %907 = vmatprep.subr.bf16.mxu0 0
      %908 = vmatpush1.bf16.msra.mxu0 0
      %909 = vmatprep.subr.bf16.mxu0 0
      %910 = vmatpush1.bf16.msra.mxu0 0
      %911 = vmatprep.subr.bf16.mxu0 0
      %912 = vmatpush1.bf16.msra.mxu0 0
      %913 = vmatprep.subr.bf16.mxu0 0
      %914 = vmatpush1.bf16.msra.mxu0 0
      %915 = vmatprep.subr.bf16.mxu0 0
      %916 = vmatpush1.bf16.msra.mxu0 0
      %917 = vmatprep.subr.bf16.mxu0 0
      %918 = vmatpush1.bf16.msra.mxu0 0
      %919 = vmatprep.subr.bf16.mxu0 0
      %920 = vmatpush1.bf16.msra.mxu0 0
      %921 = vmatprep.subr.bf16.mxu0 0
      %922 = vmatpush1.bf16.msra.mxu0 0
      %923 = vmatprep.subr.bf16.mxu0 0
      %924 = vmatpush1.bf16.msra.mxu0 0
      %925 = vmatprep.subr.bf16.mxu0 0
      %926 = vmatpush1.bf16.msra.mxu0 0
      %927 = vmatprep.subr.bf16.mxu0 0
      %928 = vmatpush1.bf16.msra.mxu0 0
      %929 = vmatprep.subr.bf16.mxu0 0
      %930 = vmatpush1.bf16.msra.mxu0 0
      %931 = vmatprep.subr.bf16.mxu0 0
      %932 = vmatpush1.bf16.msra.mxu0 0
      %933 = vmatprep.mubr.bf16.mxu0 0
      %934 = vmatmul.mubr.bf16.gmra.mrb[0].mxu0 %v881
      %v935 = vpop.f32.mrb[0].mxu0
      %v936 = vadd.f32 0.0, %v935
      %v937 = vpop.f32.mrb[0].mxu0
      %v938 = vpop.f32.mrb[0].mxu0
      %v939 = vadd.f32 0.0, %v938
      %v940 = vpop.f32.mrb[0].mxu0
      %941 = vmatprep.mubr.bf16.mxu0 0
      %942 = vmatmul.mubr.bf16.gmra.mrb[0].mxu0 %v883
      %v943 = vpop.f32.mrb[0].mxu0
      %v944 = vadd.f32 0.0, %v943
      %v945 = vpop.f32.mrb[0].mxu0
      %v946 = vpop.f32.mrb[0].mxu0
      %v947 = vadd.f32 0.0, %v946
      %v948 = vpop.f32.mrb[0].mxu0
      %949 = vmatprep.mubr.bf16.mxu0 0
      %950 = vmatmul.mubr.bf16.gmra.mrb[0].mxu0 %v885
      %v951 = vpop.f32.mrb[0].mxu0
      %v952 = vadd.f32 0.0, %v951
      %v953 = vpop.f32.mrb[0].mxu0
      %v954 = vpop.f32.mrb[0].mxu0
      %v955 = vadd.f32 0.0, %v954
      %v956 = vpop.f32.mrb[0].mxu0
      %957 = vmatprep.mubr.bf16.mxu0 0
      %958 = vmatmul.mubr.bf16.gmra.mrb[0].mxu0 %v887
      %v959 = vpop.f32.mrb[0].mxu0
      %v960 = vadd.f32 0.0, %v959
      %v961 = vpop.f32.mrb[0].mxu0
      %v962 = vpop.f32.mrb[0].mxu0
      %v963 = vadd.f32 0.0, %v962
      %v964 = vpop.f32.mrb[0].mxu0
      %965 = vmatprep.mubr.bf16.mxu0 0
      %966 = vmatmul.mubr.bf16.gmra.mrb[0].mxu0 %v889
      %v967 = vpop.f32.mrb[0].mxu0
      %v968 = vadd.f32 0.0, %v967
      %v969 = vpop.f32.mrb[0].mxu0
      %v970 = vpop.f32.mrb[0].mxu0
      %v971 = vadd.f32 0.0, %v970
      %v972 = vpop.f32.mrb[0].mxu0
      %973 = vmatprep.mubr.bf16.mxu0 0
      %974 = vmatmul.mubr.bf16.gmra.mrb[0].mxu0 %v891
      %v975 = vpop.f32.mrb[0].mxu0
      %v976 = vadd.f32 0.0, %v975
      %v977 = vpop.f32.mrb[0].mxu0
      %v978 = vpop.f32.mrb[0].mxu0
      %v979 = vadd.f32 0.0, %v978
      %v980 = vpop.f32.mrb[0].mxu0
      %981 = vmatprep.mubr.bf16.mxu0 0
      %982 = vmatmul.mubr.bf16.gmra.mrb[0].mxu0 %v893
      %v983 = vpop.f32.mrb[0].mxu0
      %v984 = vadd.f32 0.0, %v983
      %v985 = vpop.f32.mrb[0].mxu0
      %v986 = vpop.f32.mrb[0].mxu0
      %v987 = vadd.f32 0.0, %v986
      %v988 = vpop.f32.mrb[0].mxu0
      %989 = vmatprep.mubr.bf16.mxu0 0
      %990 = vmatmul.mubr.bf16.gmra.mrb[0].mxu0 %v895
      %v991 = vpop.f32.mrb[0].mxu0
      %v992 = vadd.f32 0.0, %v991
      %v993 = vpop.f32.mrb[0].mxu0
      %v994 = vpop.f32.mrb[0].mxu0
      %v995 = vadd.f32 0.0, %v994
      %v996 = vpop.f32.mrb[0].mxu0
      %997 = vdwg.mxu0
      %v1000 = vunpack.c.l.b16 %v565
      %v1001 = vunpack.c.l.b16 %v566
      %v1002 = vpack.c.b16 %v1001, %v1000
      %v1003 = vsel %vm880, %v550, 0
      %v1005 = vsel %vm880, %v552, 0
      %v1007 = vsel %vm880, %v554, 0
      %v1009 = vsel %vm880, %v556, 0
      %v1011 = vsel %vm880, %v558, 0
      %v1013 = vsel %vm880, %v560, 0
      %v1015 = vsel %vm880, %v562, 0
      %v1017 = vsel %vm880, %v564, 0
      %v1020 = vsel %vm897, %v1002, 0
      %1022 = vmatprep.subr.bf16.mxu0 0
      %1023 = vmatpush1.bf16.msra.mxu0 %v1020
      %1024 = vmatprep.subr.bf16.mxu0 0
      %1025 = vmatpush1.bf16.msra.mxu0 0
      %1026 = vmatprep.subr.bf16.mxu0 0
      %1027 = vmatpush1.bf16.msra.mxu0 0
      %1028 = vmatprep.subr.bf16.mxu0 0
      %1029 = vmatpush1.bf16.msra.mxu0 0
      %1030 = vmatprep.subr.bf16.mxu0 0
      %1031 = vmatpush1.bf16.msra.mxu0 0
      %1032 = vmatprep.subr.bf16.mxu0 0
      %1033 = vmatpush1.bf16.msra.mxu0 0
      %1034 = vmatprep.subr.bf16.mxu0 0
      %1035 = vmatpush1.bf16.msra.mxu0 0
      %1036 = vmatprep.subr.bf16.mxu0 0
      %1037 = vmatpush1.bf16.msra.mxu0 0
      %1038 = vmatprep.subr.bf16.mxu0 0
      %1039 = vmatpush1.bf16.msra.mxu0 0
      %1040 = vmatprep.subr.bf16.mxu0 0
      %1041 = vmatpush1.bf16.msra.mxu0 0
      %1042 = vmatprep.subr.bf16.mxu0 0
      %1043 = vmatpush1.bf16.msra.mxu0 0
      %1044 = vmatprep.subr.bf16.mxu0 0
      %1045 = vmatpush1.bf16.msra.mxu0 0
      %1046 = vmatprep.subr.bf16.mxu0 0
      %1047 = vmatpush1.bf16.msra.mxu0 0
      %1048 = vmatprep.subr.bf16.mxu0 0
      %1049 = vmatpush1.bf16.msra.mxu0 0
      %1050 = vmatprep.subr.bf16.mxu0 0
      %1051 = vmatpush1.bf16.msra.mxu0 0
      %1052 = vmatprep.subr.bf16.mxu0 0
      %1053 = vmatpush1.bf16.msra.mxu0 0
      %1054 = vmatprep.mubr.bf16.mxu0 0
      %1055 = vmatmul.mubr.bf16.gmra.mrb[0].mxu0 %v1003
      %v1056 = vpop.f32.mrb[0].mxu0
      %v1057 = vadd.f32 %v936, %v1056
      %v1058 = vpop.f32.mrb[0].mxu0
      %v1059 = vpop.f32.mrb[0].mxu0
      %v1060 = vadd.f32 %v939, %v1059
      %v1061 = vpop.f32.mrb[0].mxu0
      %1062 = vmatprep.mubr.bf16.mxu0 0
      %1063 = vmatmul.mubr.bf16.gmra.mrb[0].mxu0 %v1005
      %v1064 = vpop.f32.mrb[0].mxu0
      %v1065 = vadd.f32 %v944, %v1064
      %v1066 = vpop.f32.mrb[0].mxu0
      %v1067 = vpop.f32.mrb[0].mxu0
      %v1068 = vadd.f32 %v947, %v1067
      %v1069 = vpop.f32.mrb[0].mxu0
      %1070 = vmatprep.mubr.bf16.mxu0 0
      %1071 = vmatmul.mubr.bf16.gmra.mrb[0].mxu0 %v1007
      %v1072 = vpop.f32.mrb[0].mxu0
      %v1073 = vadd.f32 %v952, %v1072
      %v1074 = vpop.f32.mrb[0].mxu0
      %v1075 = vpop.f32.mrb[0].mxu0
      %v1076 = vadd.f32 %v955, %v1075
      %v1077 = vpop.f32.mrb[0].mxu0
      %1078 = vmatprep.mubr.bf16.mxu0 0
      %1079 = vmatmul.mubr.bf16.gmra.mrb[0].mxu0 %v1009
      %v1080 = vpop.f32.mrb[0].mxu0
      %v1081 = vadd.f32 %v960, %v1080
      %v1082 = vpop.f32.mrb[0].mxu0
      %v1083 = vpop.f32.mrb[0].mxu0
      %v1084 = vadd.f32 %v963, %v1083
      %v1085 = vpop.f32.mrb[0].mxu0
      %1086 = vmatprep.mubr.bf16.mxu0 0
      %1087 = vmatmul.mubr.bf16.gmra.mrb[0].mxu0 %v1011
      %v1088 = vpop.f32.mrb[0].mxu0
      %v1089 = vadd.f32 %v968, %v1088
      %v1090 = vpop.f32.mrb[0].mxu0
      %v1091 = vpop.f32.mrb[0].mxu0
      %v1092 = vadd.f32 %v971, %v1091
      %v1093 = vpop.f32.mrb[0].mxu0
      %1094 = vmatprep.mubr.bf16.mxu0 0
      %1095 = vmatmul.mubr.bf16.gmra.mrb[0].mxu0 %v1013
      %v1096 = vpop.f32.mrb[0].mxu0
      %v1097 = vadd.f32 %v976, %v1096
      %v1098 = vpop.f32.mrb[0].mxu0
      %v1099 = vpop.f32.mrb[0].mxu0
      %v1100 = vadd.f32 %v979, %v1099
      %v1101 = vpop.f32.mrb[0].mxu0
      %1102 = vmatprep.mubr.bf16.mxu0 0
      %1103 = vmatmul.mubr.bf16.gmra.mrb[0].mxu0 %v1015
      %v1104 = vpop.f32.mrb[0].mxu0
      %v1105 = vadd.f32 %v984, %v1104
      %v1106 = vpop.f32.mrb[0].mxu0
      %v1107 = vpop.f32.mrb[0].mxu0
      %v1108 = vadd.f32 %v987, %v1107
      %v1109 = vpop.f32.mrb[0].mxu0
      %1110 = vmatprep.mubr.bf16.mxu0 0
      %1111 = vmatmul.mubr.bf16.gmra.mrb[0].mxu0 %v1017
      %v1112 = vpop.f32.mrb[0].mxu0
      %v1113 = vadd.f32 %v992, %v1112
      %v1114 = vpop.f32.mrb[0].mxu0
      %v1115 = vpop.f32.mrb[0].mxu0
      %v1116 = vadd.f32 %v995, %v1115
      %v1117 = vpop.f32.mrb[0].mxu0
      %1118 = vdwg.mxu0
      %s1119 = scalar_lea.vmem %s234, 24
      %v1120 = vld [vmem:[%s1119] sm:$0xf]
      %v1121 = vld [vmem:[%s1119 + $0x4] sm:$0xf]
      %v1122 = vld [vmem:[%s1119 + $0xc] sm:$0xf]
      %v1123 = vld [vmem:[%s1119 + $0x10] sm:$0xf]
      %v1124 = vld [vmem:[%s1119 + $0x18] sm:$0xf]
      %v1125 = vld [vmem:[%s1119 + $0x1c] sm:$0xf]
      %v1126 = vld [vmem:[%s1119 + $0x24] sm:$0xf]
      %v1127 = vld [vmem:[%s1119 + $0x28] sm:$0xf]
      %v1128 = vld [vmem:[%s1119 + $0x30] sm:$0xf]
      %v1129 = vld [vmem:[%s1119 + $0x34] sm:$0xf]
      %v1130 = vld [vmem:[%s1119 + $0x3c] sm:$0xf]
      %v1131 = vld [vmem:[%s1119 + $0x40] sm:$0xf]
      %v1132 = vld [vmem:[%s1119 + $0x48] sm:$0xf]
      %v1133 = vld [vmem:[%s1119 + $0x4c] sm:$0xf]
      %v1134 = vld [vmem:[%s1119 + $0x54] sm:$0xf]
      %v1135 = vld [vmem:[%s1119 + $0x58] sm:$0xf]
      %v1136 = vld [vmem:[%s1119 + $0x8] sm:$0x1]
      %v1137 = vld [vmem:[%s1119 + $0x14] sm:$0x1]
      %v1138 = vld [vmem:[%s1119 + $0x20] sm:$0x1]
      %v1139 = vld [vmem:[%s1119 + $0x2c] sm:$0x1]
      %v1140 = vld [vmem:[%s1119 + $0x38] sm:$0x1]
      %v1141 = vld [vmem:[%s1119 + $0x44] sm:$0x1]
      %v1142 = vld [vmem:[%s1119 + $0x50] sm:$0x1]
      %v1143 = vld [vmem:[%s1119 + $0x5c] sm:$0x1]
      %v1144 = vld [vmem:[%s1119] sm:$0xe]
      %v1145 = vld [vmem:[%s1119 + $0xc] sm:$0xe]
      %v1146 = vld [vmem:[%s1119 + $0x18] sm:$0xe]
      %v1147 = vld [vmem:[%s1119 + $0x24] sm:$0xe]
      %v1148 = vld [vmem:[%s1119 + $0x30] sm:$0xe]
      %v1149 = vld [vmem:[%s1119 + $0x3c] sm:$0xe]
      %v1150 = vld [vmem:[%s1119 + $0x48] sm:$0xe]
      %v1151 = vld [vmem:[%s1119 + $0x54] sm:$0xe]
      %v1168 = vunpack.c.l.b16 %v1120
      %v1169 = vunpack.c.l.b16 %v1121
      %v1170 = vunpack.c.l.b16 %v1122
      %v1171 = vunpack.c.l.b16 %v1123
      %v1172 = vunpack.c.l.b16 %v1124
      %v1173 = vunpack.c.l.b16 %v1125
      %v1174 = vunpack.c.l.b16 %v1126
      %v1175 = vunpack.c.l.b16 %v1127
      %v1176 = vunpack.c.l.b16 %v1128
      %v1177 = vunpack.c.l.b16 %v1129
      %v1178 = vunpack.c.l.b16 %v1130
      %v1179 = vunpack.c.l.b16 %v1131
      %v1180 = vunpack.c.l.b16 %v1132
      %v1181 = vunpack.c.l.b16 %v1133
      %v1182 = vunpack.c.l.b16 %v1134
      %v1183 = vunpack.c.l.b16 %v1135
      %v1184 = vpack.c.b16 %v1169, %v1168
      %v1185 = vpack.c.b16 %v1171, %v1170
      %v1186 = vpack.c.b16 %v1173, %v1172
      %v1187 = vpack.c.b16 %v1175, %v1174
      %v1188 = vpack.c.b16 %v1177, %v1176
      %v1189 = vpack.c.b16 %v1179, %v1178
      %v1190 = vpack.c.b16 %v1181, %v1180
      %v1191 = vpack.c.b16 %v1183, %v1182
      %v1200 = vunpack.c.l.b16 %v1136
      %v1201 = vunpack.c.l.b16 %v1137
      %v1202 = vunpack.c.l.b16 %v1138
      %v1203 = vunpack.c.l.b16 %v1139
      %v1204 = vunpack.c.l.b16 %v1140
      %v1205 = vunpack.c.l.b16 %v1141
      %v1206 = vunpack.c.l.b16 %v1142
      %v1207 = vunpack.c.l.b16 %v1143
      %v1208 = vpack.c.b16 %v1200, %v1200
      %v1209 = vpack.c.b16 %v1201, %v1201
      %v1210 = vpack.c.b16 %v1202, %v1202
      %v1211 = vpack.c.b16 %v1203, %v1203
      %v1212 = vpack.c.b16 %v1204, %v1204
      %v1213 = vpack.c.b16 %v1205, %v1205
      %v1214 = vpack.c.b16 %v1206, %v1206
      %v1215 = vpack.c.b16 %v1207, %v1207
      %v1217 = vshrl.u32 %v1184, 16
      %v1219 = vshll.u32 %v1184, 16
      %v1221 = vrot.slane %v1219, 1
      %v1222 = vor.u32 %v1217, %v1221
      %v1224 = vshll.u32 %v1208, 16
      %v1226 = vrot.slane %v1224, 1
      %v1227 = vsel %vm353, %v1222, %v1226
      %v1229 = vshrl.u32 %v1185, 16
      %v1231 = vshll.u32 %v1185, 16
      %v1233 = vrot.slane %v1231, 1
      %v1234 = vor.u32 %v1229, %v1233
      %v1236 = vshll.u32 %v1209, 16
      %v1238 = vrot.slane %v1236, 1
      %v1239 = vsel %vm353, %v1234, %v1238
      %v1241 = vshrl.u32 %v1186, 16
      %v1243 = vshll.u32 %v1186, 16
      %v1245 = vrot.slane %v1243, 1
      %v1246 = vor.u32 %v1241, %v1245
      %v1248 = vshll.u32 %v1210, 16
      %v1250 = vrot.slane %v1248, 1
      %v1251 = vsel %vm353, %v1246, %v1250
      %v1253 = vshrl.u32 %v1187, 16
      %v1255 = vshll.u32 %v1187, 16
      %v1257 = vrot.slane %v1255, 1
      %v1258 = vor.u32 %v1253, %v1257
      %v1260 = vshll.u32 %v1211, 16
      %v1262 = vrot.slane %v1260, 1
      %v1263 = vsel %vm353, %v1258, %v1262
      %v1265 = vshrl.u32 %v1188, 16
      %v1267 = vshll.u32 %v1188, 16
      %v1269 = vrot.slane %v1267, 1
      %v1270 = vor.u32 %v1265, %v1269
      %v1272 = vshll.u32 %v1212, 16
      %v1274 = vrot.slane %v1272, 1
      %v1275 = vsel %vm353, %v1270, %v1274
      %v1277 = vshrl.u32 %v1189, 16
      %v1279 = vshll.u32 %v1189, 16
      %v1281 = vrot.slane %v1279, 1
      %v1282 = vor.u32 %v1277, %v1281
      %v1284 = vshll.u32 %v1213, 16
      %v1286 = vrot.slane %v1284, 1
      %v1287 = vsel %vm353, %v1282, %v1286
      %v1289 = vshrl.u32 %v1190, 16
      %v1291 = vshll.u32 %v1190, 16
      %v1293 = vrot.slane %v1291, 1
      %v1294 = vor.u32 %v1289, %v1293
      %v1296 = vshll.u32 %v1214, 16
      %v1298 = vrot.slane %v1296, 1
      %v1299 = vsel %vm353, %v1294, %v1298
      %v1301 = vshrl.u32 %v1191, 16
      %v1303 = vshll.u32 %v1191, 16
      %v1305 = vrot.slane %v1303, 1
      %v1306 = vor.u32 %v1301, %v1305
      %v1308 = vshll.u32 %v1215, 16
      %v1310 = vrot.slane %v1308, 1
      %v1311 = vsel %vm353, %v1306, %v1310
      %1312 = vrot.lane.b32.xlu0 %v1227, 4
      %v1313 = vpop.permute.xlu0 %1312
      %1314 = vrot.lane.b32.xlu0 %v1239, 4
      %v1315 = vpop.permute.xlu0 %1314
      %1316 = vrot.lane.b32.xlu0 %v1251, 4
      %v1317 = vpop.permute.xlu0 %1316
      %1318 = vrot.lane.b32.xlu0 %v1263, 4
      %v1319 = vpop.permute.xlu0 %1318
      %1320 = vrot.lane.b32.xlu0 %v1275, 4
      %v1321 = vpop.permute.xlu0 %1320
      %1322 = vrot.lane.b32.xlu0 %v1287, 4
      %v1323 = vpop.permute.xlu0 %1322
      %1324 = vrot.lane.b32.xlu0 %v1299, 4
      %v1325 = vpop.permute.xlu0 %1324
      %1326 = vrot.lane.b32.xlu0 %v1311, 4
      %v1327 = vpop.permute.xlu0 %1326
      %v1336 = vunpack.c.l.b16 %v1144
      %v1337 = vunpack.c.l.b16 %v1145
      %v1338 = vunpack.c.l.b16 %v1146
      %v1339 = vunpack.c.l.b16 %v1147
      %v1340 = vunpack.c.l.b16 %v1148
      %v1341 = vunpack.c.l.b16 %v1149
      %v1342 = vunpack.c.l.b16 %v1150
      %v1343 = vunpack.c.l.b16 %v1151
      %v1344 = vpack.c.b16 %v1169, %v1336
      %v1345 = vpack.c.b16 %v1171, %v1337
      %v1346 = vpack.c.b16 %v1173, %v1338
      %v1347 = vpack.c.b16 %v1175, %v1339
      %v1348 = vpack.c.b16 %v1177, %v1340
      %v1349 = vpack.c.b16 %v1179, %v1341
      %v1350 = vpack.c.b16 %v1181, %v1342
      %v1351 = vpack.c.b16 %v1183, %v1343
      %v1352 = vrot.slane %v1344, 1
      %v1353 = vrot.slane %v1208, 1
      %v1354 = vsel %vm490, %v1352, %v1353
      %v1355 = vrot.slane %v1345, 1
      %v1356 = vrot.slane %v1209, 1
      %v1357 = vsel %vm490, %v1355, %v1356
      %v1358 = vrot.slane %v1346, 1
      %v1359 = vrot.slane %v1210, 1
      %v1360 = vsel %vm490, %v1358, %v1359
      %v1361 = vrot.slane %v1347, 1
      %v1362 = vrot.slane %v1211, 1
      %v1363 = vsel %vm490, %v1361, %v1362
      %v1364 = vrot.slane %v1348, 1
      %v1365 = vrot.slane %v1212, 1
      %v1366 = vsel %vm490, %v1364, %v1365
      %v1367 = vrot.slane %v1349, 1
      %v1368 = vrot.slane %v1213, 1
      %v1369 = vsel %vm490, %v1367, %v1368
      %v1370 = vrot.slane %v1350, 1
      %v1371 = vrot.slane %v1214, 1
      %v1372 = vsel %vm490, %v1370, %v1371
      %v1373 = vrot.slane %v1351, 1
      %v1374 = vrot.slane %v1215, 1
      %v1375 = vsel %vm490, %v1373, %v1374
      %1376 = vrot.lane.b32.xlu0 %v1354, 8
      %v1377 = vpop.permute.xlu0 %1376
      %1378 = vrot.lane.b32.xlu0 %v1357, 8
      %v1379 = vpop.permute.xlu0 %1378
      %1380 = vrot.lane.b32.xlu0 %v1360, 8
      %v1381 = vpop.permute.xlu0 %1380
      %1382 = vrot.lane.b32.xlu0 %v1363, 8
      %v1383 = vpop.permute.xlu0 %1382
      %1384 = vrot.lane.b32.xlu0 %v1366, 8
      %v1385 = vpop.permute.xlu0 %1384
      %1386 = vrot.lane.b32.xlu0 %v1369, 8
      %v1387 = vpop.permute.xlu0 %1386
      %1388 = vrot.lane.b32.xlu0 %v1372, 8
      %v1389 = vpop.permute.xlu0 %1388
      %1390 = vrot.lane.b32.xlu0 %v1375, 8
      %v1391 = vpop.permute.xlu0 %1390
      %v1393 = vsel %vm531, %v1184, %v1313
      %v1395 = vsel %vm531, %v1185, %v1315
      %v1397 = vsel %vm531, %v1186, %v1317
      %v1399 = vsel %vm531, %v1187, %v1319
      %v1401 = vsel %vm531, %v1188, %v1321
      %v1403 = vsel %vm531, %v1189, %v1323
      %v1405 = vsel %vm531, %v1190, %v1325
      %v1407 = vsel %vm531, %v1191, %v1327
      %v1409 = vsel %vm548, %v1393, %v1377
      %v1411 = vsel %vm548, %v1395, %v1379
      %v1413 = vsel %vm548, %v1397, %v1381
      %v1415 = vsel %vm548, %v1399, %v1383
      %v1417 = vsel %vm548, %v1401, %v1385
      %v1419 = vsel %vm548, %v1403, %v1387
      %v1421 = vsel %vm548, %v1405, %v1389
      %v1423 = vsel %vm548, %v1407, %v1391
      %s1424 = scalar_lea.vmem %s238, 16
      %v1425 = vld [vmem:[%s1424] sm:$0xf]
      %v1426 = vld [vmem:[%s1424 + $0x4] sm:$0x3]
      %v1429 = vunpack.c.l.b16 %v1425
      %v1430 = vunpack.c.l.b16 %v1426
      %v1431 = vpack.c.b16 %v1430, %v1429
      %v1432 = vsel %vm880, %v1409, 0
      %v1434 = vsel %vm880, %v1411, 0
      %v1436 = vsel %vm880, %v1413, 0
      %v1438 = vsel %vm880, %v1415, 0
      %v1440 = vsel %vm880, %v1417, 0
      %v1442 = vsel %vm880, %v1419, 0
      %v1444 = vsel %vm880, %v1421, 0
      %v1446 = vsel %vm880, %v1423, 0
      %v1449 = vsel %vm897, %v1431, 0
      %1451 = vmatprep.subr.bf16.mxu0 0
      %1452 = vmatpush1.bf16.msra.mxu0 %v1449
      %1453 = vmatprep.subr.bf16.mxu0 0
      %1454 = vmatpush1.bf16.msra.mxu0 0
      %1455 = vmatprep.subr.bf16.mxu0 0
      %1456 = vmatpush1.bf16.msra.mxu0 0
      %1457 = vmatprep.subr.bf16.mxu0 0
      %1458 = vmatpush1.bf16.msra.mxu0 0
      %1459 = vmatprep.subr.bf16.mxu0 0
      %1460 = vmatpush1.bf16.msra.mxu0 0
      %1461 = vmatprep.subr.bf16.mxu0 0
      %1462 = vmatpush1.bf16.msra.mxu0 0
      %1463 = vmatprep.subr.bf16.mxu0 0
      %1464 = vmatpush1.bf16.msra.mxu0 0
      %1465 = vmatprep.subr.bf16.mxu0 0
      %1466 = vmatpush1.bf16.msra.mxu0 0
      %1467 = vmatprep.subr.bf16.mxu0 0
      %1468 = vmatpush1.bf16.msra.mxu0 0
      %1469 = vmatprep.subr.bf16.mxu0 0
      %1470 = vmatpush1.bf16.msra.mxu0 0
      %1471 = vmatprep.subr.bf16.mxu0 0
      %1472 = vmatpush1.bf16.msra.mxu0 0
      %1473 = vmatprep.subr.bf16.mxu0 0
      %1474 = vmatpush1.bf16.msra.mxu0 0
      %1475 = vmatprep.subr.bf16.mxu0 0
      %1476 = vmatpush1.bf16.msra.mxu0 0
      %1477 = vmatprep.subr.bf16.mxu0 0
      %1478 = vmatpush1.bf16.msra.mxu0 0
      %1479 = vmatprep.subr.bf16.mxu0 0
      %1480 = vmatpush1.bf16.msra.mxu0 0
      %1481 = vmatprep.subr.bf16.mxu0 0
      %1482 = vmatpush1.bf16.msra.mxu0 0
      %1483 = vmatprep.mubr.bf16.mxu0 0
      %1484 = vmatmul.mubr.bf16.gmra.mrb[0].mxu0 %v1432
      %v1485 = vpop.f32.mrb[0].mxu0
      %v1486 = vadd.f32 0.0, %v1485
      %v1487 = vpop.f32.mrb[0].mxu0
      %v1488 = vpop.f32.mrb[0].mxu0
      %v1489 = vadd.f32 0.0, %v1488
      %v1490 = vpop.f32.mrb[0].mxu0
      %1491 = vmatprep.mubr.bf16.mxu0 0
      %1492 = vmatmul.mubr.bf16.gmra.mrb[0].mxu0 %v1434
      %v1493 = vpop.f32.mrb[0].mxu0
      %v1494 = vadd.f32 0.0, %v1493
      %v1495 = vpop.f32.mrb[0].mxu0
      %v1496 = vpop.f32.mrb[0].mxu0
      %v1497 = vadd.f32 0.0, %v1496
      %v1498 = vpop.f32.mrb[0].mxu0
      %1499 = vmatprep.mubr.bf16.mxu0 0
      %1500 = vmatmul.mubr.bf16.gmra.mrb[0].mxu0 %v1436
      %v1501 = vpop.f32.mrb[0].mxu0
      %v1502 = vadd.f32 0.0, %v1501
      %v1503 = vpop.f32.mrb[0].mxu0
      %v1504 = vpop.f32.mrb[0].mxu0
      %v1505 = vadd.f32 0.0, %v1504
      %v1506 = vpop.f32.mrb[0].mxu0
      %1507 = vmatprep.mubr.bf16.mxu0 0
      %1508 = vmatmul.mubr.bf16.gmra.mrb[0].mxu0 %v1438
      %v1509 = vpop.f32.mrb[0].mxu0
      %v1510 = vadd.f32 0.0, %v1509
      %v1511 = vpop.f32.mrb[0].mxu0
      %v1512 = vpop.f32.mrb[0].mxu0
      %v1513 = vadd.f32 0.0, %v1512
      %v1514 = vpop.f32.mrb[0].mxu0
      %1515 = vmatprep.mubr.bf16.mxu0 0
      %1516 = vmatmul.mubr.bf16.gmra.mrb[0].mxu0 %v1440
      %v1517 = vpop.f32.mrb[0].mxu0
      %v1518 = vadd.f32 0.0, %v1517
      %v1519 = vpop.f32.mrb[0].mxu0
      %v1520 = vpop.f32.mrb[0].mxu0
      %v1521 = vadd.f32 0.0, %v1520
      %v1522 = vpop.f32.mrb[0].mxu0
      %1523 = vmatprep.mubr.bf16.mxu0 0
      %1524 = vmatmul.mubr.bf16.gmra.mrb[0].mxu0 %v1442
      %v1525 = vpop.f32.mrb[0].mxu0
      %v1526 = vadd.f32 0.0, %v1525
      %v1527 = vpop.f32.mrb[0].mxu0
      %v1528 = vpop.f32.mrb[0].mxu0
      %v1529 = vadd.f32 0.0, %v1528
      %v1530 = vpop.f32.mrb[0].mxu0
      %1531 = vmatprep.mubr.bf16.mxu0 0
      %1532 = vmatmul.mubr.bf16.gmra.mrb[0].mxu0 %v1444
      %v1533 = vpop.f32.mrb[0].mxu0
      %v1534 = vadd.f32 0.0, %v1533
      %v1535 = vpop.f32.mrb[0].mxu0
      %v1536 = vpop.f32.mrb[0].mxu0
      %v1537 = vadd.f32 0.0, %v1536
      %v1538 = vpop.f32.mrb[0].mxu0
      %1539 = vmatprep.mubr.bf16.mxu0 0
      %1540 = vmatmul.mubr.bf16.gmra.mrb[0].mxu0 %v1446
      %v1541 = vpop.f32.mrb[0].mxu0
      %v1542 = vadd.f32 0.0, %v1541
      %v1543 = vpop.f32.mrb[0].mxu0
      %v1544 = vpop.f32.mrb[0].mxu0
      %v1545 = vadd.f32 0.0, %v1544
      %v1546 = vpop.f32.mrb[0].mxu0
      %1547 = vdwg.mxu0
      %v1548 = vadd.f32 %v1057, %v1486
      %v1549 = vadd.f32 %v1060, %v1489
      %v1550 = vadd.f32 %v1065, %v1494
      %v1551 = vadd.f32 %v1068, %v1497
      %v1552 = vadd.f32 %v1073, %v1502
      %v1553 = vadd.f32 %v1076, %v1505
      %v1554 = vadd.f32 %v1081, %v1510
      %v1555 = vadd.f32 %v1084, %v1513
      %v1556 = vadd.f32 %v1089, %v1518
      %v1557 = vadd.f32 %v1092, %v1521
      %v1558 = vadd.f32 %v1097, %v1526
      %v1559 = vadd.f32 %v1100, %v1529
      %v1560 = vadd.f32 %v1105, %v1534
      %v1561 = vadd.f32 %v1108, %v1537
      %v1562 = vadd.f32 %v1113, %v1542
      %v1563 = vadd.f32 %v1116, %v1545
      %v1564 = vld [vmem:[%s241] sm:$0x1]
      %v1566 = vlaneseq
      %v1567 = vshrl.u32 %v1566, 7
      %v1568 = vsub.s32 0, %v1567
      %v1569 = vrot.slane %v1564, %v1568
      %v1571 = vadd.f32 %v1548, %v1569
      %v1572 = vadd.f32 %v1549, %v1569
      %v1573 = vadd.f32 %v1550, %v1569
      %v1574 = vadd.f32 %v1551, %v1569
      %v1575 = vadd.f32 %v1552, %v1569
      %v1576 = vadd.f32 %v1553, %v1569
      %v1577 = vadd.f32 %v1554, %v1569
      %v1578 = vadd.f32 %v1555, %v1569
      %v1579 = vadd.f32 %v1556, %v1569
      %v1580 = vadd.f32 %v1557, %v1569
      %v1581 = vadd.f32 %v1558, %v1569
      %v1582 = vadd.f32 %v1559, %v1569
      %v1583 = vadd.f32 %v1560, %v1569
      %v1584 = vadd.f32 %v1561, %v1569
      %v1585 = vadd.f32 %v1562, %v1569
      %v1586 = vadd.f32 %v1563, %v1569
      %v1587 = vmax.f32 %v1571, 0.0
      %v1588 = vmax.f32 %v1572, 0.0
      %v1589 = vmax.f32 %v1573, 0.0
      %v1590 = vmax.f32 %v1574, 0.0
      %v1591 = vmax.f32 %v1575, 0.0
      %v1592 = vmax.f32 %v1576, 0.0
      %v1593 = vmax.f32 %v1577, 0.0
      %v1594 = vmax.f32 %v1578, 0.0
      %v1595 = vmax.f32 %v1579, 0.0
      %v1596 = vmax.f32 %v1580, 0.0
      %v1597 = vmax.f32 %v1581, 0.0
      %v1598 = vmax.f32 %v1582, 0.0
      %v1599 = vmax.f32 %v1583, 0.0
      %v1600 = vmax.f32 %v1584, 0.0
      %v1601 = vmax.f32 %v1585, 0.0
      %v1602 = vmax.f32 %v1586, 0.0
      %1603 = vst.msk [vmem:[%s254] sm:$0xff] %vm548, %v1587
      %1604 = vst.msk [vmem:[%s254 + $0x8] sm:$0xff] %vm548, %v1588
      %1605 = vst.msk [vmem:[%s254 + $0x10] sm:$0xff] %vm548, %v1589
      %1606 = vst.msk [vmem:[%s254 + $0x18] sm:$0xff] %vm548, %v1590
      %1607 = vst.msk [vmem:[%s254 + $0x20] sm:$0xff] %vm548, %v1591
      %1608 = vst.msk [vmem:[%s254 + $0x28] sm:$0xff] %vm548, %v1592
      %1609 = vst.msk [vmem:[%s254 + $0x30] sm:$0xff] %vm548, %v1593
      %1610 = vst.msk [vmem:[%s254 + $0x38] sm:$0xff] %vm548, %v1594
      %1611 = vst.msk [vmem:[%s254 + $0x40] sm:$0xff] %vm548, %v1595
      %1612 = vst.msk [vmem:[%s254 + $0x48] sm:$0xff] %vm548, %v1596
      %1613 = vst.msk [vmem:[%s254 + $0x50] sm:$0xff] %vm548, %v1597
      %1614 = vst.msk [vmem:[%s254 + $0x58] sm:$0xff] %vm548, %v1598
      %1615 = vst.msk [vmem:[%s254 + $0x60] sm:$0xff] %vm548, %v1599
      %1616 = vst.msk [vmem:[%s254 + $0x68] sm:$0xff] %vm548, %v1600
      %1617 = vst.msk [vmem:[%s254 + $0x70] sm:$0xff] %vm548, %v1601
      %1618 = vst.msk [vmem:[%s254 + $0x78] sm:$0xff] %vm548, %v1602
      %s1619 = smul.u32 8, %s21
      %p1620 = scmp.lt.s32.totalorder %s20, 1
      %s1621 = scalar_select %p1620, %s20, 1
      %p1622 = scmp.lt.s32.totalorder %s1619, 15
      %s1623 = scalar_select %p1622, %s1619, 15
      %p1624 = scmp.lt.s32.totalorder %s19, 0
      %s1625 = scalar_select %p1624, %s19, 0
      %s1626 = smul.addr %s1623, 2
      %s1627 = sadd.s32 %s1625, %s1626
      %s1628 = smul.addr %s1621, 32
      %s1629 = sadd.s32 %s1627, %s1628
      %s1630 = smul.addr %s1629, 8
      %s1631 = scalar_lea.vmem %s3, %s1630
      // Predicated region
      $region33: #{tpu_custom_call.1} parent=31 // pred_check
        %p1632 = pneg %p135
      $region34: #{tpu_custom_call.1} parent=31 // pred_check_branch
        %1634 = sbr.rel (%p1632) target = $region36
      $region35: #{tpu_custom_call.1} parent=31 // pred_region
        %s1635 = smul.u32 8, %s21
      $region36: #{tpu_custom_call.1} parent=31 // pred_fallthru
        _
    $region32: #{tpu_custom_call.1} parent=5 // pred_fallthru
      _
    %p1636 = scmp.le.s32.totalorder 2, %s9
    // Predicated region
    $region37: #{tpu_custom_call.1} parent=5 // pred_check
      %p1637 = pneg %p1636
    $region38: #{tpu_custom_call.1} parent=5 // pred_check_branch
      %1639 = sbr.rel (%p1637) target = $region40
    $region39: #{tpu_custom_call.1} parent=5 // pred_region
      %s1640 = ssub.s32 %s9, 2
      // Predicated region
      $region41: #{tpu_custom_call.1} parent=39 // pred_check
        %p1641 = pneg %p141
      $region42: #{tpu_custom_call.1} parent=39 // pred_check_branch
        %1643 = sbr.rel (%p1641) target = $region44
      $region43: #{tpu_custom_call.1} parent=39 // pred_region
        %s1644 = smul.u32 8, %s24
        %p1645 = scmp.lt.s32.totalorder %s23, 1
        %s1646 = scalar_select %p1645, %s23, 1
        %p1647 = scmp.lt.s32.totalorder %s1644, 15
        %s1648 = scalar_select %p1647, %s1644, 15
        %p1649 = scmp.lt.s32.totalorder %s22, 0
        %s1650 = scalar_select %p1649, %s22, 0
        %s1651 = smul.addr %s1648, 2
        %s1652 = sadd.s32 %s1650, %s1651
        %s1653 = smul.addr %s1646, 32
        %s1654 = sadd.s32 %s1652, %s1653
        %s1655 = smul.addr %s1654, 8
        %s1656 = scalar_lea.vmem %s3, %s1655
      $region44: #{tpu_custom_call.1} parent=39 // pred_fallthru
        _
    $region40: #{tpu_custom_call.1} parent=5 // pred_fallthru
      _
  $region6: #{tpu_custom_call.1} parent=0 // loop_footer
    %s13 = sadd.s32 1, %s9
  $region7: #{tpu_custom_call.1} parent=0 // loop_footer_branch
    %8 = sbr.rel target = $region3
  $region8: #{tpu_custom_call.1} parent=0 // loop_exit
    _

</llo_original>
